<compile_context>
chip_gen: v7x
topology: tpu7x:2x2x1
jax: 0.10.0
libtpu: 0.0.40
codegen_flags: <defaults>
</compile_context>

<pallas_src>
import jax
import jax.numpy as jnp
from jax.experimental import pallas as pl
from jax.experimental.pallas import tpu as pltpu

# ----- config (small, consistent with the module's forward) -----
VOCAB = 20
EMB = 16
HID = 32          # encoder hidden == decoder GRU hidden size
RNN_IN = 32       # rnn.input_size == output of the `concat` linear
N_CLASSES = 20
SEQ = 8           # encoder length L
BATCH = 2
T_STEPS = 6       # number of fused decode steps


def decode_kernel(ids_ref,                                    # SMEM [T*B] int32 (scalar prefetch)
                  h0_ref, enc_ref, emb_tbl_ref,
                  wc_ref, bc_ref, wgru_ref, bgru_ref,
                  wout_ref, bout_ref,
                  out_ref, hT_ref, attn_ref):
    enc = enc_ref[...]                                        # [B, L, H] lane-dense
    wc = wc_ref[...]                                          # [E+H, RNN_IN]
    bc = bc_ref[...]                                          # [1, RNN_IN]
    wg = wgru_ref[...]                                        # [RNN_IN+H, 4H]  (lane-dense 128)
    bg = bgru_ref[...]                                        # [1, 4H]

    # --- embedding gather for ALL T*B tokens in ONE MXU pass (loop-invariant) ---
    lane_iota = jax.lax.broadcasted_iota(jnp.int32, (1, VOCAB), 1)
    onehot = jnp.concatenate(
        [(lane_iota == ids_ref[i]).astype(jnp.float32)
         for i in range(T_STEPS * BATCH)], axis=0)            # [T*B, VOCAB]
    emb_all = jnp.dot(onehot, emb_tbl_ref[...],
                      preferred_element_type=jnp.float32)     # [T*B, E]

    h = h0_ref[...]                                           # [B, H]
    attns, hiddens = [], []

    # --- serial recurrence, fully unrolled inside the single grid step ---
    for t in range(T_STEPS):
        emb = emb_all[t * BATCH:(t + 1) * BATCH, :]           # [B, E] (static slice)

        # upstream dot-product attention vs. previous hidden state
        scores = jnp.sum(enc * h[:, None, :], axis=-1)        # [B, L]
        m = jnp.max(scores, axis=-1, keepdims=True)
        e = jnp.exp(scores - m)
        denom = jnp.sum(e, axis=-1, keepdims=True)
        attn = e * pl.reciprocal(denom, approx=False)         # softmax over L
        attns.append(attn)

        # context[b, :] = sum_l attn[b, l] * enc[b, l, :]
        context = jnp.sum(enc * attn[:, :, None], axis=1)     # [B, H]

        # concat linear + tanh -> rnn_input
        concat_in = jnp.concatenate([emb, context], axis=-1)  # [B, E+H]
        rnn_in = jnp.tanh(
            jnp.dot(concat_in, wc, preferred_element_type=jnp.float32) + bc)

        # GRU cell step: one 128-lane-wide fused matmul
        #   cols [0:H)    -> i_r + h_r  (biases pre-summed)
        #   cols [H:2H)   -> i_z + h_z  (biases pre-summed)
        #   cols [2H:3H)  -> i_n (+ b_in)      (zeros in h rows)
        #   cols [3H:4H)  -> h_n (+ b_hn)      (zeros in x rows)
        x = jnp.concatenate([rnn_in, h], axis=-1)             # [B, RNN_IN+H]
        gates = jnp.dot(x, wg, preferred_element_type=jnp.float32) + bg   # [B, 4H]
        r = jax.nn.sigmoid(gates[:, :HID])
        z = jax.nn.sigmoid(gates[:, HID:2 * HID])
        n = jnp.tanh(gates[:, 2 * HID:3 * HID] + r * gates[:, 3 * HID:])
        h = (1.0 - z) * n + z * h                             # [B, H]
        hiddens.append(h)

    # --- single dense writebacks -----------------------------------------
    hT_ref[...] = h                                           # final hidden, once
    attn_ref[...] = jnp.stack(attns, axis=0)                  # [T, B, L], once

    # deferred output projection + batched log_softmax across all T steps
    h_all = jnp.concatenate(hiddens, axis=0)                  # [T*B, H]
    logits = jnp.dot(h_all, wout_ref[...],
                     preferred_element_type=jnp.float32) + bout_ref[...]   # [T*B, C]
    mx = jnp.max(logits, axis=-1, keepdims=True)
    lse = jnp.log(jnp.sum(jnp.exp(logits - mx), axis=-1, keepdims=True)) + mx
    out_ref[...] = (logits - lse).reshape(T_STEPS, BATCH, N_CLASSES)


def rnn_decoder_s2s_decode(tokens, hidden, encoder_outputs, params):
    """Runs T teacher-forced RNNDecoderS2S.forward_upstream steps in ONE pallas_call.

    Args:
      tokens:           [T, B] int32 token ids (input token for each decode step)
      hidden:           tuple of length 1, hidden[0] has shape [1, B, HID] (GRU)
      encoder_outputs:  [L, B, HID]
      params:           dict of weights (same layout as the PyTorch module)
    Returns:
      (log_probs [T, B, C], final hidden (tuple: [1, B, HID]), attn [T, L, B])
      where step t matches the module's single-step forward exactly.
    """
    T, B = tokens.shape
    L = encoder_outputs.shape[0]
    h0 = hidden[0][0]                                          # [B, HID]
    enc_blh = jnp.transpose(encoder_outputs, (1, 0, 2))        # [B, L, HID] lane-dense

    # Lane-dense fused GRU weight [RNN_IN+H, 4H] (PyTorch gate order r, z, n):
    #   x rows : [ W_ir | W_iz | W_in | 0    ]
    #   h rows : [ W_hr | W_hz | 0    | W_hn ]
    w_ih = params["w_ih_t"]                                    # [RNN_IN, 3H]
    w_hh = params["w_hh_t"]                                    # [HID,    3H]
    w_gru = jnp.concatenate([
        jnp.concatenate([w_ih[:, :2 * HID], w_ih[:, 2 * HID:],
                         jnp.zeros((RNN_IN, HID), jnp.float32)], axis=1),
        jnp.concatenate([w_hh[:, :2 * HID],
                         jnp.zeros((HID, HID), jnp.float32),
                         w_hh[:, 2 * HID:]], axis=1),
    ], axis=0)                                                 # [RNN_IN+H, 4H]
    b_gru = jnp.concatenate([
        params["b_ih"][:, :2 * HID] + params["b_hh"][:, :2 * HID],   # r,z pre-summed
        params["b_ih"][:, 2 * HID:],                                 # b_in
        params["b_hh"][:, 2 * HID:],                                 # b_hn
    ], axis=1)                                                 # [1, 4H]

    const2 = lambda i, ids: (0, 0)
    const3 = lambda i, ids: (0, 0, 0)

    grid_spec = pltpu.PrefetchScalarGridSpec(
        num_scalar_prefetch=1,
        grid=(1,),                                             # whole decode = one step
        in_specs=[
            pl.BlockSpec((B, HID), const2),                    # h0
            pl.BlockSpec((B, L, HID), const3),                 # encoder outputs [B,L,H]
            pl.BlockSpec((VOCAB, EMB), const2),                # embedding table
            pl.BlockSpec((EMB + HID, RNN_IN), const2),         # concat linear W
            pl.BlockSpec((1, RNN_IN), const2),                 # concat linear b
            pl.BlockSpec((RNN_IN + HID, 4 * HID), const2),     # fused GRU W (128 lanes)
            pl.BlockSpec((1, 4 * HID), const2),                # fused GRU b
            pl.BlockSpec((HID, N_CLASSES), const2),            # out linear W
            pl.BlockSpec((1, N_CLASSES), const2),              # out linear b
        ],
        out_specs=(
            pl.BlockSpec((T, B, N_CLASSES), const3),           # all log-probs, one block
            pl.BlockSpec((B, HID), const2),                    # final hidden
            pl.BlockSpec((T, B, L), const3),                   # all attentions, one block
        ),
    )

    out, h_T, attn_tbl = pl.pallas_call(
        decode_kernel,
        out_shape=(
            jax.ShapeDtypeStruct((T, B, N_CLASSES), jnp.float32),
            jax.ShapeDtypeStruct((B, HID), jnp.float32),
            jax.ShapeDtypeStruct((T, B, L), jnp.float32),
        ),
        grid_spec=grid_spec,
        compiler_params=pltpu.CompilerParams(
            dimension_semantics=("arbitrary",)),
    )(tokens.reshape(-1).astype(jnp.int32),                    # flat 1-D ids (SMEM hygiene)
      h0, enc_blh, params["emb_table"],
      params["w_concat"], params["b_concat"], w_gru, b_gru,
      params["w_out"], params["b_out"])

    attn = jnp.transpose(attn_tbl, (0, 2, 1))                  # [T, L, B] (module convention)
    return out, (h_T[None, :, :],), attn


def reference_decode(tokens, hidden, encoder_outputs, params):
    """Pure-JAX reference: T independent calls of the module's forward_upstream."""
    h = hidden[0][0]
    outs, attns = [], []
    for t in range(tokens.shape[0]):
        emb = jnp.take(params["emb_table"], tokens[t], axis=0)            # [B, E]
        scores = jnp.sum(encoder_outputs * h[None], axis=-1)              # [L, B]
        attn = jax.nn.softmax(scores, axis=0)
        context = jnp.sum(encoder_outputs * attn[:, :, None], axis=0)     # [B, H]
        rnn_in = jnp.tanh(jnp.concatenate([emb, context], -1) @ params["w_concat"]
                          + params["b_concat"])
        gi = rnn_in @ params["w_ih_t"] + params["b_ih"]
        gh = h @ params["w_hh_t"] + params["b_hh"]
        i_r, i_z, i_n = jnp.split(gi, 3, axis=-1)
        h_r, h_z, h_n = jnp.split(gh, 3, axis=-1)
        r = jax.nn.sigmoid(i_r + h_r)
        z = jax.nn.sigmoid(i_z + h_z)
        n = jnp.tanh(i_n + r * h_n)
        h = (1.0 - z) * n + z * h
        logits = h @ params["w_out"] + params["b_out"]
        outs.append(jax.nn.log_softmax(logits, axis=-1))
        attns.append(attn)
    return jnp.stack(outs), (h[None],), jnp.stack(attns)   # [T,B,C], ([1,B,H],), [T,L,B]


def init_params(key):
    ks = jax.random.split(key, 8)
    s = 0.1
    return {
        "emb_table": s * jax.random.normal(ks[0], (VOCAB, EMB), jnp.float32),
        "w_concat":  s * jax.random.normal(ks[1], (EMB + HID, RNN_IN), jnp.float32),
        "b_concat":  jnp.zeros((1, RNN_IN), jnp.float32),
        # GRU weights stored pre-transposed ([in, 3H], gate order r|z|n).
        "w_ih_t":    s * jax.random.normal(ks[2], (RNN_IN, 3 * HID), jnp.float32),
        "w_hh_t":    s * jax.random.normal(ks[3], (HID, 3 * HID), jnp.float32),
        "b_ih":      s * jax.random.normal(ks[4], (1, 3 * HID), jnp.float32),
        "b_hh":      s * jax.random.normal(ks[5], (1, 3 * HID), jnp.float32),
        "w_out":     s * jax.random.normal(ks[6], (HID, N_CLASSES), jnp.float32),
        "b_out":     s * jax.random.normal(ks[7], (1, N_CLASSES), jnp.float32),
    }


if __name__ == "__main__":
    key = jax.random.PRNGKey(0)
    k_tok, k_h, k_enc, k_p = jax.random.split(key, 4)

    params = init_params(k_p)
    tokens = jax.random.randint(k_tok, (T_STEPS, BATCH), 0, VOCAB, dtype=jnp.int32)
    hidden = (jax.random.normal(k_h, (1, BATCH, HID), jnp.float32),)
    encoder_outputs = jax.random.normal(k_enc, (SEQ, BATCH, HID), jnp.float32)

    out, new_hidden, attn = rnn_decoder_s2s_decode(tokens, hidden, encoder_outputs, params)
    jax.block_until_ready((out, new_hidden, attn))

    ref_out, ref_hidden, ref_attn = reference_decode(tokens, hidden, encoder_outputs, params)
    assert out.shape == (T_STEPS, BATCH, N_CLASSES)
    assert new_hidden[0].shape == (1, BATCH, HID)
    assert attn.shape == (T_STEPS, SEQ, BATCH)
    assert jnp.allclose(out, ref_out, atol=1e-4)
    assert jnp.allclose(new_hidden[0], ref_hidden[0], atol=1e-4)
    assert jnp.allclose(attn, ref_attn, atol=1e-4)

    print("KERNEL_OK")
</pallas_src>

<mosaic_0001>
module attributes {stable_mosaic.version = 11 : i64} {
  func.func @decode_kernel(%arg0: i32, %arg1: memref<12xi32, #tpu.memory_space<smem>>, %arg2: memref<2x32xf32, #tpu.memory_space<vmem>>, %arg3: memref<2x8x32xf32, #tpu.memory_space<vmem>>, %arg4: memref<20x16xf32, #tpu.memory_space<vmem>>, %arg5: memref<48x32xf32, #tpu.memory_space<vmem>>, %arg6: memref<1x32xf32, #tpu.memory_space<vmem>>, %arg7: memref<64x128xf32, #tpu.memory_space<vmem>>, %arg8: memref<1x128xf32, #tpu.memory_space<vmem>>, %arg9: memref<32x20xf32, #tpu.memory_space<vmem>>, %arg10: memref<1x20xf32, #tpu.memory_space<vmem>>, %arg11: memref<6x2x20xf32, #tpu.memory_space<vmem>>, %arg12: memref<2x32xf32, #tpu.memory_space<vmem>>, %arg13: memref<6x2x8xf32, #tpu.memory_space<vmem>>) attributes {dimension_semantics = [#tpu.dimension_semantics<arbitrary>], iteration_bounds = array<i64: 1>, scalar_prefetch = 1 : i64, scratch_operands = 0 : i64, tpu.core_type = #tpu.core_type<tc>, window_params = [{pipeline_mode = #tpu.pipeline_mode<synchronous>, transform_indices = @transform_0, window_bounds = array<i64: 2, 32>}, {pipeline_mode = #tpu.pipeline_mode<synchronous>, transform_indices = @transform_1, window_bounds = array<i64: 2, 8, 32>}, {pipeline_mode = #tpu.pipeline_mode<synchronous>, transform_indices = @transform_2, window_bounds = array<i64: 20, 16>}, {pipeline_mode = #tpu.pipeline_mode<synchronous>, transform_indices = @transform_3, window_bounds = array<i64: 48, 32>}, {pipeline_mode = #tpu.pipeline_mode<synchronous>, transform_indices = @transform_4, window_bounds = array<i64: 1, 32>}, {pipeline_mode = #tpu.pipeline_mode<synchronous>, transform_indices = @transform_5, window_bounds = array<i64: 64, 128>}, {pipeline_mode = #tpu.pipeline_mode<synchronous>, transform_indices = @transform_6, window_bounds = array<i64: 1, 128>}, {pipeline_mode = #tpu.pipeline_mode<synchronous>, transform_indices = @transform_7, window_bounds = array<i64: 32, 20>}, {pipeline_mode = #tpu.pipeline_mode<synchronous>, transform_indices = @transform_8, window_bounds = array<i64: 1, 20>}, {pipeline_mode = #tpu.pipeline_mode<synchronous>, transform_indices = @transform_9, window_bounds = array<i64: 6, 2, 20>}, {pipeline_mode = #tpu.pipeline_mode<synchronous>, transform_indices = @transform_10, window_bounds = array<i64: 2, 32>}, {pipeline_mode = #tpu.pipeline_mode<synchronous>, transform_indices = @transform_11, window_bounds = array<i64: 6, 2, 8>}]} {
    %c0 = arith.constant 0 : index
    %c0_0 = arith.constant 0 : index
    %c0_1 = arith.constant 0 : index
    %0 = vector.load %arg3[%c0, %c0_0, %c0_1] : memref<2x8x32xf32, #tpu.memory_space<vmem>>, vector<2x8x32xf32>
    %c0_2 = arith.constant 0 : index
    %c0_3 = arith.constant 0 : index
    %1 = vector.load %arg5[%c0_2, %c0_3] : memref<48x32xf32, #tpu.memory_space<vmem>>, vector<48x32xf32>
    %c0_4 = arith.constant 0 : index
    %c0_5 = arith.constant 0 : index
    %2 = vector.load %arg6[%c0_4, %c0_5] : memref<1x32xf32, #tpu.memory_space<vmem>>, vector<1x32xf32>
    %c0_6 = arith.constant 0 : index
    %c0_7 = arith.constant 0 : index
    %3 = vector.load %arg7[%c0_6, %c0_7] : memref<64x128xf32, #tpu.memory_space<vmem>>, vector<64x128xf32>
    %c0_8 = arith.constant 0 : index
    %c0_9 = arith.constant 0 : index
    %4 = vector.load %arg8[%c0_8, %c0_9] : memref<1x128xf32, #tpu.memory_space<vmem>>, vector<1x128xf32>
    %5 = tpu.iota {dimensions = array<i32: 1>} : vector<1x20xi32>
    %c0_10 = arith.constant 0 : index
    %6 = memref.load %arg1[%c0_10] : memref<12xi32, #tpu.memory_space<smem>>
    %7 = vector.broadcast %6 : i32 to vector<1x20xi32>
    %8 = arith.cmpi eq, %5, %7 : vector<1x20xi32>
    %9 = arith.extui %8 : vector<1x20xi1> to vector<1x20xi32>
    %10 = arith.sitofp %9 : vector<1x20xi32> to vector<1x20xf32>
    %c1 = arith.constant 1 : index
    %11 = memref.load %arg1[%c1] : memref<12xi32, #tpu.memory_space<smem>>
    %12 = vector.broadcast %11 : i32 to vector<1x20xi32>
    %13 = arith.cmpi eq, %5, %12 : vector<1x20xi32>
    %14 = arith.extui %13 : vector<1x20xi1> to vector<1x20xi32>
    %15 = arith.sitofp %14 : vector<1x20xi32> to vector<1x20xf32>
    %c2 = arith.constant 2 : index
    %16 = memref.load %arg1[%c2] : memref<12xi32, #tpu.memory_space<smem>>
    %17 = vector.broadcast %16 : i32 to vector<1x20xi32>
    %18 = arith.cmpi eq, %5, %17 : vector<1x20xi32>
    %19 = arith.extui %18 : vector<1x20xi1> to vector<1x20xi32>
    %20 = arith.sitofp %19 : vector<1x20xi32> to vector<1x20xf32>
    %c3 = arith.constant 3 : index
    %21 = memref.load %arg1[%c3] : memref<12xi32, #tpu.memory_space<smem>>
    %22 = vector.broadcast %21 : i32 to vector<1x20xi32>
    %23 = arith.cmpi eq, %5, %22 : vector<1x20xi32>
    %24 = arith.extui %23 : vector<1x20xi1> to vector<1x20xi32>
    %25 = arith.sitofp %24 : vector<1x20xi32> to vector<1x20xf32>
    %c4 = arith.constant 4 : index
    %26 = memref.load %arg1[%c4] : memref<12xi32, #tpu.memory_space<smem>>
    %27 = vector.broadcast %26 : i32 to vector<1x20xi32>
    %28 = arith.cmpi eq, %5, %27 : vector<1x20xi32>
    %29 = arith.extui %28 : vector<1x20xi1> to vector<1x20xi32>
    %30 = arith.sitofp %29 : vector<1x20xi32> to vector<1x20xf32>
    %c5 = arith.constant 5 : index
    %31 = memref.load %arg1[%c5] : memref<12xi32, #tpu.memory_space<smem>>
    %32 = vector.broadcast %31 : i32 to vector<1x20xi32>
    %33 = arith.cmpi eq, %5, %32 : vector<1x20xi32>
    %34 = arith.extui %33 : vector<1x20xi1> to vector<1x20xi32>
    %35 = arith.sitofp %34 : vector<1x20xi32> to vector<1x20xf32>
    %c6 = arith.constant 6 : index
    %36 = memref.load %arg1[%c6] : memref<12xi32, #tpu.memory_space<smem>>
    %37 = vector.broadcast %36 : i32 to vector<1x20xi32>
    %38 = arith.cmpi eq, %5, %37 : vector<1x20xi32>
    %39 = arith.extui %38 : vector<1x20xi1> to vector<1x20xi32>
    %40 = arith.sitofp %39 : vector<1x20xi32> to vector<1x20xf32>
    %c7 = arith.constant 7 : index
    %41 = memref.load %arg1[%c7] : memref<12xi32, #tpu.memory_space<smem>>
    %42 = vector.broadcast %41 : i32 to vector<1x20xi32>
    %43 = arith.cmpi eq, %5, %42 : vector<1x20xi32>
    %44 = arith.extui %43 : vector<1x20xi1> to vector<1x20xi32>
    %45 = arith.sitofp %44 : vector<1x20xi32> to vector<1x20xf32>
    %c8 = arith.constant 8 : index
    %46 = memref.load %arg1[%c8] : memref<12xi32, #tpu.memory_space<smem>>
    %47 = vector.broadcast %46 : i32 to vector<1x20xi32>
    %48 = arith.cmpi eq, %5, %47 : vector<1x20xi32>
    %49 = arith.extui %48 : vector<1x20xi1> to vector<1x20xi32>
    %50 = arith.sitofp %49 : vector<1x20xi32> to vector<1x20xf32>
    %c9 = arith.constant 9 : index
    %51 = memref.load %arg1[%c9] : memref<12xi32, #tpu.memory_space<smem>>
    %52 = vector.broadcast %51 : i32 to vector<1x20xi32>
    %53 = arith.cmpi eq, %5, %52 : vector<1x20xi32>
    %54 = arith.extui %53 : vector<1x20xi1> to vector<1x20xi32>
    %55 = arith.sitofp %54 : vector<1x20xi32> to vector<1x20xf32>
    %c10 = arith.constant 10 : index
    %56 = memref.load %arg1[%c10] : memref<12xi32, #tpu.memory_space<smem>>
    %57 = vector.broadcast %56 : i32 to vector<1x20xi32>
    %58 = arith.cmpi eq, %5, %57 : vector<1x20xi32>
    %59 = arith.extui %58 : vector<1x20xi1> to vector<1x20xi32>
    %60 = arith.sitofp %59 : vector<1x20xi32> to vector<1x20xf32>
    %c11 = arith.constant 11 : index
    %61 = memref.load %arg1[%c11] : memref<12xi32, #tpu.memory_space<smem>>
    %62 = vector.broadcast %61 : i32 to vector<1x20xi32>
    %63 = arith.cmpi eq, %5, %62 : vector<1x20xi32>
    %64 = arith.extui %63 : vector<1x20xi1> to vector<1x20xi32>
    %65 = arith.sitofp %64 : vector<1x20xi32> to vector<1x20xf32>
    %66 = tpu.concatenate %10, %15, %20, %25, %30, %35, %40, %45, %50, %55, %60, %65 in 0 : vector<1x20xf32>, vector<1x20xf32>, vector<1x20xf32>, vector<1x20xf32>, vector<1x20xf32>, vector<1x20xf32>, vector<1x20xf32>, vector<1x20xf32>, vector<1x20xf32>, vector<1x20xf32>, vector<1x20xf32>, vector<1x20xf32> -> vector<12x20xf32>
    %c0_11 = arith.constant 0 : index
    %c0_12 = arith.constant 0 : index
    %67 = vector.load %arg4[%c0_11, %c0_12] : memref<20x16xf32, #tpu.memory_space<vmem>>, vector<20x16xf32>
    %cst = arith.constant dense<0.000000e+00> : vector<12x16xf32>
    %68 = tpu.matmul %66, %67, %cst {dimension_numbers = #tpu.dot_dimension_numbers<[1], [0], [0], [1], [0, 0, 1, 1], [], []>} : vector<12x20xf32>, vector<20x16xf32>, vector<12x16xf32> -> vector<12x16xf32>
    %c0_13 = arith.constant 0 : index
    %c0_14 = arith.constant 0 : index
    %69 = vector.load %arg2[%c0_13, %c0_14] : memref<2x32xf32, #tpu.memory_space<vmem>>, vector<2x32xf32>
    %70 = vector.extract_strided_slice %68 {offsets = [0, 0], sizes = [2, 16], strides = [1, 1]} : vector<12x16xf32> to vector<2x16xf32>
    %71 = vector.shape_cast %69 : vector<2x32xf32> to vector<2x1x32xf32>
    %72 = vector.broadcast %71 : vector<2x1x32xf32> to vector<2x8x32xf32>
    %73 = arith.mulf %0, %72 : vector<2x8x32xf32>
    %cst_15 = arith.constant dense<0.000000e+00> : vector<2x8xf32>
    %74 = vector.multi_reduction <add>, %73, %cst_15 [2] : vector<2x8x32xf32> to vector<2x8xf32>
    %cst_16 = arith.constant dense<0xFF800000> : vector<2xf32>
    %75 = vector.multi_reduction <maximumf>, %74, %cst_16 [1] : vector<2x8xf32> to vector<2xf32>
    %76 = vector.shape_cast %75 : vector<2xf32> to vector<2x1xf32>
    %77 = vector.broadcast %76 : vector<2x1xf32> to vector<2x8xf32>
    %78 = arith.subf %74, %77 : vector<2x8xf32>
    %79 = math.exp %78 : vector<2x8xf32>
    %cst_17 = arith.constant dense<0.000000e+00> : vector<2xf32>
    %80 = vector.multi_reduction <add>, %79, %cst_17 [1] : vector<2x8xf32> to vector<2xf32>
    %81 = vector.shape_cast %80 : vector<2xf32> to vector<2x1xf32>
    %82 = tpu.reciprocal %81 : vector<2x1xf32> -> vector<2x1xf32>
    %83 = vector.broadcast %82 : vector<2x1xf32> to vector<2x8xf32>
    %84 = arith.mulf %79, %83 : vector<2x8xf32>
    %85 = vector.shape_cast %84 : vector<2x8xf32> to vector<2x8x1xf32>
    %86 = vector.broadcast %85 : vector<2x8x1xf32> to vector<2x8x32xf32>
    %87 = arith.mulf %0, %86 : vector<2x8x32xf32>
    %cst_18 = arith.constant dense<0.000000e+00> : vector<2x32xf32>
    %88 = vector.multi_reduction <add>, %87, %cst_18 [1] : vector<2x8x32xf32> to vector<2x32xf32>
    %89 = tpu.concatenate %70, %88 in 1 : vector<2x16xf32>, vector<2x32xf32> -> vector<2x48xf32>
    %cst_19 = arith.constant dense<0.000000e+00> : vector<2x32xf32>
    %90 = tpu.matmul %89, %1, %cst_19 {dimension_numbers = #tpu.dot_dimension_numbers<[1], [0], [0], [1], [0, 0, 1, 1], [], []>} : vector<2x48xf32>, vector<48x32xf32>, vector<2x32xf32> -> vector<2x32xf32>
    %91 = vector.broadcast %2 : vector<1x32xf32> to vector<2x32xf32>
    %92 = arith.addf %90, %91 : vector<2x32xf32>
    %93 = math.tanh %92 : vector<2x32xf32>
    %94 = tpu.concatenate %93, %69 in 1 : vector<2x32xf32>, vector<2x32xf32> -> vector<2x64xf32>
    %cst_20 = arith.constant dense<0.000000e+00> : vector<2x128xf32>
    %95 = tpu.matmul %94, %3, %cst_20 {dimension_numbers = #tpu.dot_dimension_numbers<[1], [0], [0], [1], [0, 0, 1, 1], [], []>} : vector<2x64xf32>, vector<64x128xf32>, vector<2x128xf32> -> vector<2x128xf32>
    %96 = vector.broadcast %4 : vector<1x128xf32> to vector<2x128xf32>
    %97 = arith.addf %95, %96 : vector<2x128xf32>
    %98 = vector.extract_strided_slice %97 {offsets = [0, 0], sizes = [2, 32], strides = [1, 1]} : vector<2x128xf32> to vector<2x32xf32>
    %99 = arith.negf %98 : vector<2x32xf32>
    %100 = math.exp %99 : vector<2x32xf32>
    %cst_21 = arith.constant 1.000000e+00 : f32
    %101 = vector.broadcast %cst_21 : f32 to vector<2x32xf32>
    %102 = arith.addf %101, %100 : vector<2x32xf32>
    %103 = arith.divf %101, %102 : vector<2x32xf32>
    %104 = vector.extract_strided_slice %97 {offsets = [0, 32], sizes = [2, 32], strides = [1, 1]} : vector<2x128xf32> to vector<2x32xf32>
    %105 = arith.negf %104 : vector<2x32xf32>
    %106 = math.exp %105 : vector<2x32xf32>
    %cst_22 = arith.constant 1.000000e+00 : f32
    %107 = vector.broadcast %cst_22 : f32 to vector<2x32xf32>
    %108 = arith.addf %107, %106 : vector<2x32xf32>
    %109 = arith.divf %107, %108 : vector<2x32xf32>
    %110 = vector.extract_strided_slice %97 {offsets = [0, 64], sizes = [2, 32], strides = [1, 1]} : vector<2x128xf32> to vector<2x32xf32>
    %111 = vector.extract_strided_slice %97 {offsets = [0, 96], sizes = [2, 32], strides = [1, 1]} : vector<2x128xf32> to vector<2x32xf32>
    %112 = arith.mulf %103, %111 : vector<2x32xf32>
    %113 = arith.addf %110, %112 : vector<2x32xf32>
    %114 = math.tanh %113 : vector<2x32xf32>
    %cst_23 = arith.constant 1.000000e+00 : f32
    %115 = vector.broadcast %cst_23 : f32 to vector<2x32xf32>
    %116 = arith.subf %115, %109 : vector<2x32xf32>
    %117 = arith.mulf %116, %114 : vector<2x32xf32>
    %118 = arith.mulf %109, %69 : vector<2x32xf32>
    %119 = arith.addf %117, %118 : vector<2x32xf32>
    %120 = vector.extract_strided_slice %68 {offsets = [2, 0], sizes = [2, 16], strides = [1, 1]} : vector<12x16xf32> to vector<2x16xf32>
    %121 = vector.shape_cast %119 : vector<2x32xf32> to vector<2x1x32xf32>
    %122 = vector.broadcast %121 : vector<2x1x32xf32> to vector<2x8x32xf32>
    %123 = arith.mulf %0, %122 : vector<2x8x32xf32>
    %cst_24 = arith.constant dense<0.000000e+00> : vector<2x8xf32>
    %124 = vector.multi_reduction <add>, %123, %cst_24 [2] : vector<2x8x32xf32> to vector<2x8xf32>
    %cst_25 = arith.constant dense<0xFF800000> : vector<2xf32>
    %125 = vector.multi_reduction <maximumf>, %124, %cst_25 [1] : vector<2x8xf32> to vector<2xf32>
    %126 = vector.shape_cast %125 : vector<2xf32> to vector<2x1xf32>
    %127 = vector.broadcast %126 : vector<2x1xf32> to vector<2x8xf32>
    %128 = arith.subf %124, %127 : vector<2x8xf32>
    %129 = math.exp %128 : vector<2x8xf32>
    %cst_26 = arith.constant dense<0.000000e+00> : vector<2xf32>
    %130 = vector.multi_reduction <add>, %129, %cst_26 [1] : vector<2x8xf32> to vector<2xf32>
    %131 = vector.shape_cast %130 : vector<2xf32> to vector<2x1xf32>
    %132 = tpu.reciprocal %131 : vector<2x1xf32> -> vector<2x1xf32>
    %133 = vector.broadcast %132 : vector<2x1xf32> to vector<2x8xf32>
    %134 = arith.mulf %129, %133 : vector<2x8xf32>
    %135 = vector.shape_cast %134 : vector<2x8xf32> to vector<2x8x1xf32>
    %136 = vector.broadcast %135 : vector<2x8x1xf32> to vector<2x8x32xf32>
    %137 = arith.mulf %0, %136 : vector<2x8x32xf32>
    %cst_27 = arith.constant dense<0.000000e+00> : vector<2x32xf32>
    %138 = vector.multi_reduction <add>, %137, %cst_27 [1] : vector<2x8x32xf32> to vector<2x32xf32>
    %139 = tpu.concatenate %120, %138 in 1 : vector<2x16xf32>, vector<2x32xf32> -> vector<2x48xf32>
    %cst_28 = arith.constant dense<0.000000e+00> : vector<2x32xf32>
    %140 = tpu.matmul %139, %1, %cst_28 {dimension_numbers = #tpu.dot_dimension_numbers<[1], [0], [0], [1], [0, 0, 1, 1], [], []>} : vector<2x48xf32>, vector<48x32xf32>, vector<2x32xf32> -> vector<2x32xf32>
    %141 = vector.broadcast %2 : vector<1x32xf32> to vector<2x32xf32>
    %142 = arith.addf %140, %141 : vector<2x32xf32>
    %143 = math.tanh %142 : vector<2x32xf32>
    %144 = tpu.concatenate %143, %119 in 1 : vector<2x32xf32>, vector<2x32xf32> -> vector<2x64xf32>
    %cst_29 = arith.constant dense<0.000000e+00> : vector<2x128xf32>
    %145 = tpu.matmul %144, %3, %cst_29 {dimension_numbers = #tpu.dot_dimension_numbers<[1], [0], [0], [1], [0, 0, 1, 1], [], []>} : vector<2x64xf32>, vector<64x128xf32>, vector<2x128xf32> -> vector<2x128xf32>
    %146 = vector.broadcast %4 : vector<1x128xf32> to vector<2x128xf32>
    %147 = arith.addf %145, %146 : vector<2x128xf32>
    %148 = vector.extract_strided_slice %147 {offsets = [0, 0], sizes = [2, 32], strides = [1, 1]} : vector<2x128xf32> to vector<2x32xf32>
    %149 = arith.negf %148 : vector<2x32xf32>
    %150 = math.exp %149 : vector<2x32xf32>
    %cst_30 = arith.constant 1.000000e+00 : f32
    %151 = vector.broadcast %cst_30 : f32 to vector<2x32xf32>
    %152 = arith.addf %151, %150 : vector<2x32xf32>
    %153 = arith.divf %151, %152 : vector<2x32xf32>
    %154 = vector.extract_strided_slice %147 {offsets = [0, 32], sizes = [2, 32], strides = [1, 1]} : vector<2x128xf32> to vector<2x32xf32>
    %155 = arith.negf %154 : vector<2x32xf32>
    %156 = math.exp %155 : vector<2x32xf32>
    %cst_31 = arith.constant 1.000000e+00 : f32
    %157 = vector.broadcast %cst_31 : f32 to vector<2x32xf32>
    %158 = arith.addf %157, %156 : vector<2x32xf32>
    %159 = arith.divf %157, %158 : vector<2x32xf32>
    %160 = vector.extract_strided_slice %147 {offsets = [0, 64], sizes = [2, 32], strides = [1, 1]} : vector<2x128xf32> to vector<2x32xf32>
    %161 = vector.extract_strided_slice %147 {offsets = [0, 96], sizes = [2, 32], strides = [1, 1]} : vector<2x128xf32> to vector<2x32xf32>
    %162 = arith.mulf %153, %161 : vector<2x32xf32>
    %163 = arith.addf %160, %162 : vector<2x32xf32>
    %164 = math.tanh %163 : vector<2x32xf32>
    %cst_32 = arith.constant 1.000000e+00 : f32
    %165 = vector.broadcast %cst_32 : f32 to vector<2x32xf32>
    %166 = arith.subf %165, %159 : vector<2x32xf32>
    %167 = arith.mulf %166, %164 : vector<2x32xf32>
    %168 = arith.mulf %159, %119 : vector<2x32xf32>
    %169 = arith.addf %167, %168 : vector<2x32xf32>
    %170 = vector.extract_strided_slice %68 {offsets = [4, 0], sizes = [2, 16], strides = [1, 1]} : vector<12x16xf32> to vector<2x16xf32>
    %171 = vector.shape_cast %169 : vector<2x32xf32> to vector<2x1x32xf32>
    %172 = vector.broadcast %171 : vector<2x1x32xf32> to vector<2x8x32xf32>
    %173 = arith.mulf %0, %172 : vector<2x8x32xf32>
    %cst_33 = arith.constant dense<0.000000e+00> : vector<2x8xf32>
    %174 = vector.multi_reduction <add>, %173, %cst_33 [2] : vector<2x8x32xf32> to vector<2x8xf32>
    %cst_34 = arith.constant dense<0xFF800000> : vector<2xf32>
    %175 = vector.multi_reduction <maximumf>, %174, %cst_34 [1] : vector<2x8xf32> to vector<2xf32>
    %176 = vector.shape_cast %175 : vector<2xf32> to vector<2x1xf32>
    %177 = vector.broadcast %176 : vector<2x1xf32> to vector<2x8xf32>
    %178 = arith.subf %174, %177 : vector<2x8xf32>
    %179 = math.exp %178 : vector<2x8xf32>
    %cst_35 = arith.constant dense<0.000000e+00> : vector<2xf32>
    %180 = vector.multi_reduction <add>, %179, %cst_35 [1] : vector<2x8xf32> to vector<2xf32>
    %181 = vector.shape_cast %180 : vector<2xf32> to vector<2x1xf32>
    %182 = tpu.reciprocal %181 : vector<2x1xf32> -> vector<2x1xf32>
    %183 = vector.broadcast %182 : vector<2x1xf32> to vector<2x8xf32>
    %184 = arith.mulf %179, %183 : vector<2x8xf32>
    %185 = vector.shape_cast %184 : vector<2x8xf32> to vector<2x8x1xf32>
    %186 = vector.broadcast %185 : vector<2x8x1xf32> to vector<2x8x32xf32>
    %187 = arith.mulf %0, %186 : vector<2x8x32xf32>
    %cst_36 = arith.constant dense<0.000000e+00> : vector<2x32xf32>
    %188 = vector.multi_reduction <add>, %187, %cst_36 [1] : vector<2x8x32xf32> to vector<2x32xf32>
    %189 = tpu.concatenate %170, %188 in 1 : vector<2x16xf32>, vector<2x32xf32> -> vector<2x48xf32>
    %cst_37 = arith.constant dense<0.000000e+00> : vector<2x32xf32>
    %190 = tpu.matmul %189, %1, %cst_37 {dimension_numbers = #tpu.dot_dimension_numbers<[1], [0], [0], [1], [0, 0, 1, 1], [], []>} : vector<2x48xf32>, vector<48x32xf32>, vector<2x32xf32> -> vector<2x32xf32>
    %191 = vector.broadcast %2 : vector<1x32xf32> to vector<2x32xf32>
    %192 = arith.addf %190, %191 : vector<2x32xf32>
    %193 = math.tanh %192 : vector<2x32xf32>
    %194 = tpu.concatenate %193, %169 in 1 : vector<2x32xf32>, vector<2x32xf32> -> vector<2x64xf32>
    %cst_38 = arith.constant dense<0.000000e+00> : vector<2x128xf32>
    %195 = tpu.matmul %194, %3, %cst_38 {dimension_numbers = #tpu.dot_dimension_numbers<[1], [0], [0], [1], [0, 0, 1, 1], [], []>} : vector<2x64xf32>, vector<64x128xf32>, vector<2x128xf32> -> vector<2x128xf32>
    %196 = vector.broadcast %4 : vector<1x128xf32> to vector<2x128xf32>
    %197 = arith.addf %195, %196 : vector<2x128xf32>
    %198 = vector.extract_strided_slice %197 {offsets = [0, 0], sizes = [2, 32], strides = [1, 1]} : vector<2x128xf32> to vector<2x32xf32>
    %199 = arith.negf %198 : vector<2x32xf32>
    %200 = math.exp %199 : vector<2x32xf32>
    %cst_39 = arith.constant 1.000000e+00 : f32
    %201 = vector.broadcast %cst_39 : f32 to vector<2x32xf32>
    %202 = arith.addf %201, %200 : vector<2x32xf32>
    %203 = arith.divf %201, %202 : vector<2x32xf32>
    %204 = vector.extract_strided_slice %197 {offsets = [0, 32], sizes = [2, 32], strides = [1, 1]} : vector<2x128xf32> to vector<2x32xf32>
    %205 = arith.negf %204 : vector<2x32xf32>
    %206 = math.exp %205 : vector<2x32xf32>
    %cst_40 = arith.constant 1.000000e+00 : f32
    %207 = vector.broadcast %cst_40 : f32 to vector<2x32xf32>
    %208 = arith.addf %207, %206 : vector<2x32xf32>
    %209 = arith.divf %207, %208 : vector<2x32xf32>
    %210 = vector.extract_strided_slice %197 {offsets = [0, 64], sizes = [2, 32], strides = [1, 1]} : vector<2x128xf32> to vector<2x32xf32>
    %211 = vector.extract_strided_slice %197 {offsets = [0, 96], sizes = [2, 32], strides = [1, 1]} : vector<2x128xf32> to vector<2x32xf32>
    %212 = arith.mulf %203, %211 : vector<2x32xf32>
    %213 = arith.addf %210, %212 : vector<2x32xf32>
    %214 = math.tanh %213 : vector<2x32xf32>
    %cst_41 = arith.constant 1.000000e+00 : f32
    %215 = vector.broadcast %cst_41 : f32 to vector<2x32xf32>
    %216 = arith.subf %215, %209 : vector<2x32xf32>
    %217 = arith.mulf %216, %214 : vector<2x32xf32>
    %218 = arith.mulf %209, %169 : vector<2x32xf32>
    %219 = arith.addf %217, %218 : vector<2x32xf32>
    %220 = vector.extract_strided_slice %68 {offsets = [6, 0], sizes = [2, 16], strides = [1, 1]} : vector<12x16xf32> to vector<2x16xf32>
    %221 = vector.shape_cast %219 : vector<2x32xf32> to vector<2x1x32xf32>
    %222 = vector.broadcast %221 : vector<2x1x32xf32> to vector<2x8x32xf32>
    %223 = arith.mulf %0, %222 : vector<2x8x32xf32>
    %cst_42 = arith.constant dense<0.000000e+00> : vector<2x8xf32>
    %224 = vector.multi_reduction <add>, %223, %cst_42 [2] : vector<2x8x32xf32> to vector<2x8xf32>
    %cst_43 = arith.constant dense<0xFF800000> : vector<2xf32>
    %225 = vector.multi_reduction <maximumf>, %224, %cst_43 [1] : vector<2x8xf32> to vector<2xf32>
    %226 = vector.shape_cast %225 : vector<2xf32> to vector<2x1xf32>
    %227 = vector.broadcast %226 : vector<2x1xf32> to vector<2x8xf32>
    %228 = arith.subf %224, %227 : vector<2x8xf32>
    %229 = math.exp %228 : vector<2x8xf32>
    %cst_44 = arith.constant dense<0.000000e+00> : vector<2xf32>
    %230 = vector.multi_reduction <add>, %229, %cst_44 [1] : vector<2x8xf32> to vector<2xf32>
    %231 = vector.shape_cast %230 : vector<2xf32> to vector<2x1xf32>
    %232 = tpu.reciprocal %231 : vector<2x1xf32> -> vector<2x1xf32>
    %233 = vector.broadcast %232 : vector<2x1xf32> to vector<2x8xf32>
    %234 = arith.mulf %229, %233 : vector<2x8xf32>
    %235 = vector.shape_cast %234 : vector<2x8xf32> to vector<2x8x1xf32>
    %236 = vector.broadcast %235 : vector<2x8x1xf32> to vector<2x8x32xf32>
    %237 = arith.mulf %0, %236 : vector<2x8x32xf32>
    %cst_45 = arith.constant dense<0.000000e+00> : vector<2x32xf32>
    %238 = vector.multi_reduction <add>, %237, %cst_45 [1] : vector<2x8x32xf32> to vector<2x32xf32>
    %239 = tpu.concatenate %220, %238 in 1 : vector<2x16xf32>, vector<2x32xf32> -> vector<2x48xf32>
    %cst_46 = arith.constant dense<0.000000e+00> : vector<2x32xf32>
    %240 = tpu.matmul %239, %1, %cst_46 {dimension_numbers = #tpu.dot_dimension_numbers<[1], [0], [0], [1], [0, 0, 1, 1], [], []>} : vector<2x48xf32>, vector<48x32xf32>, vector<2x32xf32> -> vector<2x32xf32>
    %241 = vector.broadcast %2 : vector<1x32xf32> to vector<2x32xf32>
    %242 = arith.addf %240, %241 : vector<2x32xf32>
    %243 = math.tanh %242 : vector<2x32xf32>
    %244 = tpu.concatenate %243, %219 in 1 : vector<2x32xf32>, vector<2x32xf32> -> vector<2x64xf32>
    %cst_47 = arith.constant dense<0.000000e+00> : vector<2x128xf32>
    %245 = tpu.matmul %244, %3, %cst_47 {dimension_numbers = #tpu.dot_dimension_numbers<[1], [0], [0], [1], [0, 0, 1, 1], [], []>} : vector<2x64xf32>, vector<64x128xf32>, vector<2x128xf32> -> vector<2x128xf32>
    %246 = vector.broadcast %4 : vector<1x128xf32> to vector<2x128xf32>
    %247 = arith.addf %245, %246 : vector<2x128xf32>
    %248 = vector.extract_strided_slice %247 {offsets = [0, 0], sizes = [2, 32], strides = [1, 1]} : vector<2x128xf32> to vector<2x32xf32>
    %249 = arith.negf %248 : vector<2x32xf32>
    %250 = math.exp %249 : vector<2x32xf32>
    %cst_48 = arith.constant 1.000000e+00 : f32
    %251 = vector.broadcast %cst_48 : f32 to vector<2x32xf32>
    %252 = arith.addf %251, %250 : vector<2x32xf32>
    %253 = arith.divf %251, %252 : vector<2x32xf32>
    %254 = vector.extract_strided_slice %247 {offsets = [0, 32], sizes = [2, 32], strides = [1, 1]} : vector<2x128xf32> to vector<2x32xf32>
    %255 = arith.negf %254 : vector<2x32xf32>
    %256 = math.exp %255 : vector<2x32xf32>
    %cst_49 = arith.constant 1.000000e+00 : f32
    %257 = vector.broadcast %cst_49 : f32 to vector<2x32xf32>
    %258 = arith.addf %257, %256 : vector<2x32xf32>
    %259 = arith.divf %257, %258 : vector<2x32xf32>
    %260 = vector.extract_strided_slice %247 {offsets = [0, 64], sizes = [2, 32], strides = [1, 1]} : vector<2x128xf32> to vector<2x32xf32>
    %261 = vector.extract_strided_slice %247 {offsets = [0, 96], sizes = [2, 32], strides = [1, 1]} : vector<2x128xf32> to vector<2x32xf32>
    %262 = arith.mulf %253, %261 : vector<2x32xf32>
    %263 = arith.addf %260, %262 : vector<2x32xf32>
    %264 = math.tanh %263 : vector<2x32xf32>
    %cst_50 = arith.constant 1.000000e+00 : f32
    %265 = vector.broadcast %cst_50 : f32 to vector<2x32xf32>
    %266 = arith.subf %265, %259 : vector<2x32xf32>
    %267 = arith.mulf %266, %264 : vector<2x32xf32>
    %268 = arith.mulf %259, %219 : vector<2x32xf32>
    %269 = arith.addf %267, %268 : vector<2x32xf32>
    %270 = vector.extract_strided_slice %68 {offsets = [8, 0], sizes = [2, 16], strides = [1, 1]} : vector<12x16xf32> to vector<2x16xf32>
    %271 = vector.shape_cast %269 : vector<2x32xf32> to vector<2x1x32xf32>
    %272 = vector.broadcast %271 : vector<2x1x32xf32> to vector<2x8x32xf32>
    %273 = arith.mulf %0, %272 : vector<2x8x32xf32>
    %cst_51 = arith.constant dense<0.000000e+00> : vector<2x8xf32>
    %274 = vector.multi_reduction <add>, %273, %cst_51 [2] : vector<2x8x32xf32> to vector<2x8xf32>
    %cst_52 = arith.constant dense<0xFF800000> : vector<2xf32>
    %275 = vector.multi_reduction <maximumf>, %274, %cst_52 [1] : vector<2x8xf32> to vector<2xf32>
    %276 = vector.shape_cast %275 : vector<2xf32> to vector<2x1xf32>
    %277 = vector.broadcast %276 : vector<2x1xf32> to vector<2x8xf32>
    %278 = arith.subf %274, %277 : vector<2x8xf32>
    %279 = math.exp %278 : vector<2x8xf32>
    %cst_53 = arith.constant dense<0.000000e+00> : vector<2xf32>
    %280 = vector.multi_reduction <add>, %279, %cst_53 [1] : vector<2x8xf32> to vector<2xf32>
    %281 = vector.shape_cast %280 : vector<2xf32> to vector<2x1xf32>
    %282 = tpu.reciprocal %281 : vector<2x1xf32> -> vector<2x1xf32>
    %283 = vector.broadcast %282 : vector<2x1xf32> to vector<2x8xf32>
    %284 = arith.mulf %279, %283 : vector<2x8xf32>
    %285 = vector.shape_cast %284 : vector<2x8xf32> to vector<2x8x1xf32>
    %286 = vector.broadcast %285 : vector<2x8x1xf32> to vector<2x8x32xf32>
    %287 = arith.mulf %0, %286 : vector<2x8x32xf32>
    %cst_54 = arith.constant dense<0.000000e+00> : vector<2x32xf32>
    %288 = vector.multi_reduction <add>, %287, %cst_54 [1] : vector<2x8x32xf32> to vector<2x32xf32>
    %289 = tpu.concatenate %270, %288 in 1 : vector<2x16xf32>, vector<2x32xf32> -> vector<2x48xf32>
    %cst_55 = arith.constant dense<0.000000e+00> : vector<2x32xf32>
    %290 = tpu.matmul %289, %1, %cst_55 {dimension_numbers = #tpu.dot_dimension_numbers<[1], [0], [0], [1], [0, 0, 1, 1], [], []>} : vector<2x48xf32>, vector<48x32xf32>, vector<2x32xf32> -> vector<2x32xf32>
    %291 = vector.broadcast %2 : vector<1x32xf32> to vector<2x32xf32>
    %292 = arith.addf %290, %291 : vector<2x32xf32>
    %293 = math.tanh %292 : vector<2x32xf32>
    %294 = tpu.concatenate %293, %269 in 1 : vector<2x32xf32>, vector<2x32xf32> -> vector<2x64xf32>
    %cst_56 = arith.constant dense<0.000000e+00> : vector<2x128xf32>
    %295 = tpu.matmul %294, %3, %cst_56 {dimension_numbers = #tpu.dot_dimension_numbers<[1], [0], [0], [1], [0, 0, 1, 1], [], []>} : vector<2x64xf32>, vector<64x128xf32>, vector<2x128xf32> -> vector<2x128xf32>
    %296 = vector.broadcast %4 : vector<1x128xf32> to vector<2x128xf32>
    %297 = arith.addf %295, %296 : vector<2x128xf32>
    %298 = vector.extract_strided_slice %297 {offsets = [0, 0], sizes = [2, 32], strides = [1, 1]} : vector<2x128xf32> to vector<2x32xf32>
    %299 = arith.negf %298 : vector<2x32xf32>
    %300 = math.exp %299 : vector<2x32xf32>
    %cst_57 = arith.constant 1.000000e+00 : f32
    %301 = vector.broadcast %cst_57 : f32 to vector<2x32xf32>
    %302 = arith.addf %301, %300 : vector<2x32xf32>
    %303 = arith.divf %301, %302 : vector<2x32xf32>
    %304 = vector.extract_strided_slice %297 {offsets = [0, 32], sizes = [2, 32], strides = [1, 1]} : vector<2x128xf32> to vector<2x32xf32>
    %305 = arith.negf %304 : vector<2x32xf32>
    %306 = math.exp %305 : vector<2x32xf32>
    %cst_58 = arith.constant 1.000000e+00 : f32
    %307 = vector.broadcast %cst_58 : f32 to vector<2x32xf32>
    %308 = arith.addf %307, %306 : vector<2x32xf32>
    %309 = arith.divf %307, %308 : vector<2x32xf32>
    %310 = vector.extract_strided_slice %297 {offsets = [0, 64], sizes = [2, 32], strides = [1, 1]} : vector<2x128xf32> to vector<2x32xf32>
    %311 = vector.extract_strided_slice %297 {offsets = [0, 96], sizes = [2, 32], strides = [1, 1]} : vector<2x128xf32> to vector<2x32xf32>
    %312 = arith.mulf %303, %311 : vector<2x32xf32>
    %313 = arith.addf %310, %312 : vector<2x32xf32>
    %314 = math.tanh %313 : vector<2x32xf32>
    %cst_59 = arith.constant 1.000000e+00 : f32
    %315 = vector.broadcast %cst_59 : f32 to vector<2x32xf32>
    %316 = arith.subf %315, %309 : vector<2x32xf32>
    %317 = arith.mulf %316, %314 : vector<2x32xf32>
    %318 = arith.mulf %309, %269 : vector<2x32xf32>
    %319 = arith.addf %317, %318 : vector<2x32xf32>
    %320 = vector.extract_strided_slice %68 {offsets = [10, 0], sizes = [2, 16], strides = [1, 1]} : vector<12x16xf32> to vector<2x16xf32>
    %321 = vector.shape_cast %319 : vector<2x32xf32> to vector<2x1x32xf32>
    %322 = vector.broadcast %321 : vector<2x1x32xf32> to vector<2x8x32xf32>
    %323 = arith.mulf %0, %322 : vector<2x8x32xf32>
    %cst_60 = arith.constant dense<0.000000e+00> : vector<2x8xf32>
    %324 = vector.multi_reduction <add>, %323, %cst_60 [2] : vector<2x8x32xf32> to vector<2x8xf32>
    %cst_61 = arith.constant dense<0xFF800000> : vector<2xf32>
    %325 = vector.multi_reduction <maximumf>, %324, %cst_61 [1] : vector<2x8xf32> to vector<2xf32>
    %326 = vector.shape_cast %325 : vector<2xf32> to vector<2x1xf32>
    %327 = vector.broadcast %326 : vector<2x1xf32> to vector<2x8xf32>
    %328 = arith.subf %324, %327 : vector<2x8xf32>
    %329 = math.exp %328 : vector<2x8xf32>
    %cst_62 = arith.constant dense<0.000000e+00> : vector<2xf32>
    %330 = vector.multi_reduction <add>, %329, %cst_62 [1] : vector<2x8xf32> to vector<2xf32>
    %331 = vector.shape_cast %330 : vector<2xf32> to vector<2x1xf32>
    %332 = tpu.reciprocal %331 : vector<2x1xf32> -> vector<2x1xf32>
    %333 = vector.broadcast %332 : vector<2x1xf32> to vector<2x8xf32>
    %334 = arith.mulf %329, %333 : vector<2x8xf32>
    %335 = vector.shape_cast %334 : vector<2x8xf32> to vector<2x8x1xf32>
    %336 = vector.broadcast %335 : vector<2x8x1xf32> to vector<2x8x32xf32>
    %337 = arith.mulf %0, %336 : vector<2x8x32xf32>
    %cst_63 = arith.constant dense<0.000000e+00> : vector<2x32xf32>
    %338 = vector.multi_reduction <add>, %337, %cst_63 [1] : vector<2x8x32xf32> to vector<2x32xf32>
    %339 = tpu.concatenate %320, %338 in 1 : vector<2x16xf32>, vector<2x32xf32> -> vector<2x48xf32>
    %cst_64 = arith.constant dense<0.000000e+00> : vector<2x32xf32>
    %340 = tpu.matmul %339, %1, %cst_64 {dimension_numbers = #tpu.dot_dimension_numbers<[1], [0], [0], [1], [0, 0, 1, 1], [], []>} : vector<2x48xf32>, vector<48x32xf32>, vector<2x32xf32> -> vector<2x32xf32>
    %341 = vector.broadcast %2 : vector<1x32xf32> to vector<2x32xf32>
    %342 = arith.addf %340, %341 : vector<2x32xf32>
    %343 = math.tanh %342 : vector<2x32xf32>
    %344 = tpu.concatenate %343, %319 in 1 : vector<2x32xf32>, vector<2x32xf32> -> vector<2x64xf32>
    %cst_65 = arith.constant dense<0.000000e+00> : vector<2x128xf32>
    %345 = tpu.matmul %344, %3, %cst_65 {dimension_numbers = #tpu.dot_dimension_numbers<[1], [0], [0], [1], [0, 0, 1, 1], [], []>} : vector<2x64xf32>, vector<64x128xf32>, vector<2x128xf32> -> vector<2x128xf32>
    %346 = vector.broadcast %4 : vector<1x128xf32> to vector<2x128xf32>
    %347 = arith.addf %345, %346 : vector<2x128xf32>
    %348 = vector.extract_strided_slice %347 {offsets = [0, 0], sizes = [2, 32], strides = [1, 1]} : vector<2x128xf32> to vector<2x32xf32>
    %349 = arith.negf %348 : vector<2x32xf32>
    %350 = math.exp %349 : vector<2x32xf32>
    %cst_66 = arith.constant 1.000000e+00 : f32
    %351 = vector.broadcast %cst_66 : f32 to vector<2x32xf32>
    %352 = arith.addf %351, %350 : vector<2x32xf32>
    %353 = arith.divf %351, %352 : vector<2x32xf32>
    %354 = vector.extract_strided_slice %347 {offsets = [0, 32], sizes = [2, 32], strides = [1, 1]} : vector<2x128xf32> to vector<2x32xf32>
    %355 = arith.negf %354 : vector<2x32xf32>
    %356 = math.exp %355 : vector<2x32xf32>
    %cst_67 = arith.constant 1.000000e+00 : f32
    %357 = vector.broadcast %cst_67 : f32 to vector<2x32xf32>
    %358 = arith.addf %357, %356 : vector<2x32xf32>
    %359 = arith.divf %357, %358 : vector<2x32xf32>
    %360 = vector.extract_strided_slice %347 {offsets = [0, 64], sizes = [2, 32], strides = [1, 1]} : vector<2x128xf32> to vector<2x32xf32>
    %361 = vector.extract_strided_slice %347 {offsets = [0, 96], sizes = [2, 32], strides = [1, 1]} : vector<2x128xf32> to vector<2x32xf32>
    %362 = arith.mulf %353, %361 : vector<2x32xf32>
    %363 = arith.addf %360, %362 : vector<2x32xf32>
    %364 = math.tanh %363 : vector<2x32xf32>
    %cst_68 = arith.constant 1.000000e+00 : f32
    %365 = vector.broadcast %cst_68 : f32 to vector<2x32xf32>
    %366 = arith.subf %365, %359 : vector<2x32xf32>
    %367 = arith.mulf %366, %364 : vector<2x32xf32>
    %368 = arith.mulf %359, %319 : vector<2x32xf32>
    %369 = arith.addf %367, %368 : vector<2x32xf32>
    %c0_69 = arith.constant 0 : index
    %c0_70 = arith.constant 0 : index
    %370 = vector.load %arg12[%c0_69, %c0_70] : memref<2x32xf32, #tpu.memory_space<vmem>>, vector<2x32xf32>
    tpu.vector_store %arg12[%c0_69, %c0_70], %369 {strides = array<i32>} : memref<2x32xf32, #tpu.memory_space<vmem>>, vector<2x32xf32>,
    %371 = vector.shape_cast %84 : vector<2x8xf32> to vector<1x2x8xf32>
    %372 = vector.shape_cast %134 : vector<2x8xf32> to vector<1x2x8xf32>
    %373 = vector.shape_cast %184 : vector<2x8xf32> to vector<1x2x8xf32>
    %374 = vector.shape_cast %234 : vector<2x8xf32> to vector<1x2x8xf32>
    %375 = vector.shape_cast %284 : vector<2x8xf32> to vector<1x2x8xf32>
    %376 = vector.shape_cast %334 : vector<2x8xf32> to vector<1x2x8xf32>
    %377 = tpu.concatenate %371, %372, %373, %374, %375, %376 in 0 : vector<1x2x8xf32>, vector<1x2x8xf32>, vector<1x2x8xf32>, vector<1x2x8xf32>, vector<1x2x8xf32>, vector<1x2x8xf32> -> vector<6x2x8xf32>
    %c0_71 = arith.constant 0 : index
    %c0_72 = arith.constant 0 : index
    %c0_73 = arith.constant 0 : index
    %378 = vector.load %arg13[%c0_71, %c0_72, %c0_73] : memref<6x2x8xf32, #tpu.memory_space<vmem>>, vector<6x2x8xf32>
    tpu.vector_store %arg13[%c0_71, %c0_72, %c0_73], %377 {strides = array<i32>} : memref<6x2x8xf32, #tpu.memory_space<vmem>>, vector<6x2x8xf32>,
    %379 = tpu.concatenate %119, %169, %219, %269, %319, %369 in 0 : vector<2x32xf32>, vector<2x32xf32>, vector<2x32xf32>, vector<2x32xf32>, vector<2x32xf32>, vector<2x32xf32> -> vector<12x32xf32>
    %c0_74 = arith.constant 0 : index
    %c0_75 = arith.constant 0 : index
    %380 = vector.load %arg9[%c0_74, %c0_75] : memref<32x20xf32, #tpu.memory_space<vmem>>, vector<32x20xf32>
    %cst_76 = arith.constant dense<0.000000e+00> : vector<12x20xf32>
    %381 = tpu.matmul %379, %380, %cst_76 {dimension_numbers = #tpu.dot_dimension_numbers<[1], [0], [0], [1], [0, 0, 1, 1], [], []>} : vector<12x32xf32>, vector<32x20xf32>, vector<12x20xf32> -> vector<12x20xf32>
    %c0_77 = arith.constant 0 : index
    %c0_78 = arith.constant 0 : index
    %382 = vector.load %arg10[%c0_77, %c0_78] : memref<1x20xf32, #tpu.memory_space<vmem>>, vector<1x20xf32>
    %383 = vector.broadcast %382 : vector<1x20xf32> to vector<12x20xf32>
    %384 = arith.addf %381, %383 : vector<12x20xf32>
    %cst_79 = arith.constant dense<0xFF800000> : vector<12xf32>
    %385 = vector.multi_reduction <maximumf>, %384, %cst_79 [1] : vector<12x20xf32> to vector<12xf32>
    %386 = vector.shape_cast %385 : vector<12xf32> to vector<12x1xf32>
    %387 = vector.broadcast %386 : vector<12x1xf32> to vector<12x20xf32>
    %388 = arith.subf %384, %387 : vector<12x20xf32>
    %389 = math.exp %388 : vector<12x20xf32>
    %cst_80 = arith.constant dense<0.000000e+00> : vector<12xf32>
    %390 = vector.multi_reduction <add>, %389, %cst_80 [1] : vector<12x20xf32> to vector<12xf32>
    %391 = vector.shape_cast %390 : vector<12xf32> to vector<12x1xf32>
    %392 = math.log %391 : vector<12x1xf32>
    %393 = arith.addf %392, %386 : vector<12x1xf32>
    %394 = vector.broadcast %393 : vector<12x1xf32> to vector<12x20xf32>
    %395 = arith.subf %384, %394 : vector<12x20xf32>
    %396 = vector.shape_cast %395 : vector<12x20xf32> to vector<6x2x20xf32>
    %c0_81 = arith.constant 0 : index
    %c0_82 = arith.constant 0 : index
    %c0_83 = arith.constant 0 : index
    %397 = vector.load %arg11[%c0_81, %c0_82, %c0_83] : memref<6x2x20xf32, #tpu.memory_space<vmem>>, vector<6x2x20xf32>
    tpu.vector_store %arg11[%c0_81, %c0_82, %c0_83], %396 {strides = array<i32>} : memref<6x2x20xf32, #tpu.memory_space<vmem>>, vector<6x2x20xf32>,
    return
  }
  func.func @transform_0(%arg0: i32, %arg1: memref<12xi32, #tpu.memory_space<smem>>) -> (i32, i32) {
    %c0_i32 = arith.constant 0 : i32
    %c0_i32_0 = arith.constant 0 : i32
    %c0_i32_1 = arith.constant 0 : i32
    return %c0_i32, %c0_i32_0 : i32, i32
  }
  func.func @transform_1(%arg0: i32, %arg1: memref<12xi32, #tpu.memory_space<smem>>) -> (i32, i32, i32) {
    %c0_i32 = arith.constant 0 : i32
    %c0_i32_0 = arith.constant 0 : i32
    %c0_i32_1 = arith.constant 0 : i32
    %c0_i32_2 = arith.constant 0 : i32
    return %c0_i32, %c0_i32_0, %c0_i32_1 : i32, i32, i32
  }
  func.func @transform_2(%arg0: i32, %arg1: memref<12xi32, #tpu.memory_space<smem>>) -> (i32, i32) {
    %c0_i32 = arith.constant 0 : i32
    %c0_i32_0 = arith.constant 0 : i32
    %c0_i32_1 = arith.constant 0 : i32
    return %c0_i32, %c0_i32_0 : i32, i32
  }
  func.func @transform_3(%arg0: i32, %arg1: memref<12xi32, #tpu.memory_space<smem>>) -> (i32, i32) {
    %c0_i32 = arith.constant 0 : i32
    %c0_i32_0 = arith.constant 0 : i32
    %c0_i32_1 = arith.constant 0 : i32
    return %c0_i32, %c0_i32_0 : i32, i32
  }
  func.func @transform_4(%arg0: i32, %arg1: memref<12xi32, #tpu.memory_space<smem>>) -> (i32, i32) {
    %c0_i32 = arith.constant 0 : i32
    %c0_i32_0 = arith.constant 0 : i32
    %c0_i32_1 = arith.constant 0 : i32
    return %c0_i32, %c0_i32_0 : i32, i32
  }
  func.func @transform_5(%arg0: i32, %arg1: memref<12xi32, #tpu.memory_space<smem>>) -> (i32, i32) {
    %c0_i32 = arith.constant 0 : i32
    %c0_i32_0 = arith.constant 0 : i32
    %c0_i32_1 = arith.constant 0 : i32
    return %c0_i32, %c0_i32_0 : i32, i32
  }
  func.func @transform_6(%arg0: i32, %arg1: memref<12xi32, #tpu.memory_space<smem>>) -> (i32, i32) {
    %c0_i32 = arith.constant 0 : i32
    %c0_i32_0 = arith.constant 0 : i32
    %c0_i32_1 = arith.constant 0 : i32
    return %c0_i32, %c0_i32_0 : i32, i32
  }
  func.func @transform_7(%arg0: i32, %arg1: memref<12xi32, #tpu.memory_space<smem>>) -> (i32, i32) {
    %c0_i32 = arith.constant 0 : i32
    %c0_i32_0 = arith.constant 0 : i32
    %c0_i32_1 = arith.constant 0 : i32
    return %c0_i32, %c0_i32_0 : i32, i32
  }
  func.func @transform_8(%arg0: i32, %arg1: memref<12xi32, #tpu.memory_space<smem>>) -> (i32, i32) {
    %c0_i32 = arith.constant 0 : i32
    %c0_i32_0 = arith.constant 0 : i32
    %c0_i32_1 = arith.constant 0 : i32
    return %c0_i32, %c0_i32_0 : i32, i32
  }
  func.func @transform_9(%arg0: i32, %arg1: memref<12xi32, #tpu.memory_space<smem>>) -> (i32, i32, i32) {
    %c0_i32 = arith.constant 0 : i32
    %c0_i32_0 = arith.constant 0 : i32
    %c0_i32_1 = arith.constant 0 : i32
    %c0_i32_2 = arith.constant 0 : i32
    return %c0_i32, %c0_i32_0, %c0_i32_1 : i32, i32, i32
  }
  func.func @transform_10(%arg0: i32, %arg1: memref<12xi32, #tpu.memory_space<smem>>) -> (i32, i32) {
    %c0_i32 = arith.constant 0 : i32
    %c0_i32_0 = arith.constant 0 : i32
    %c0_i32_1 = arith.constant 0 : i32
    return %c0_i32, %c0_i32_0 : i32, i32
  }
  func.func @transform_11(%arg0: i32, %arg1: memref<12xi32, #tpu.memory_space<smem>>) -> (i32, i32, i32) {
    %c0_i32 = arith.constant 0 : i32
    %c0_i32_0 = arith.constant 0 : i32
    %c0_i32_1 = arith.constant 0 : i32
    %c0_i32_2 = arith.constant 0 : i32
    return %c0_i32, %c0_i32_0, %c0_i32_1 : i32, i32, i32
  }
}

</mosaic_0001>

<llo_original>
// kernel: tpu_custom_call.1
$region0: #{tpu_custom_call.1}
  #allocation0 [shape = 'u32[]', space=smem, size = 0x4, offset = 0x4, fixed_abs, tag = 'smem constant byte address 0x4 - core index']
  #allocation1 [shape = 'u32[144,128]{1,0:T(1,128)}', space=vmem, size = 0x12000, scoped, tag = 'internal scratch']
  #allocation2 [shape = 's32[1]{0}', space=sflag, size = 0x4, scoped, tag = 'scoped memory for tpu_custom_call.1']
  #allocation3 [shape = 'u8[512]{0}', space=smem, size = 0x200, scoped, tag = 'prefetched SMEM operand 0']
  %s0 = inlined_call_operand.vmem [shape: s32[12], index: 0, kind: input, shape index: {}]
  %s1 = inlined_call_operand.vmem [shape: f32[2,32], index: 1, kind: input, shape index: {}]
  %s2 = inlined_call_operand.vmem [shape: f32[2,8,32], index: 2, kind: input, shape index: {}]
  %s3 = inlined_call_operand.vmem [shape: f32[20,16], index: 3, kind: input, shape index: {}]
  %s4 = inlined_call_operand.vmem [shape: f32[48,32], index: 4, kind: input, shape index: {}]
  %s5 = inlined_call_operand.vmem [shape: f32[1,32], index: 5, kind: input, shape index: {}]
  %s6 = inlined_call_operand.vmem [shape: f32[64,128], index: 6, kind: input, shape index: {}]
  %s7 = inlined_call_operand.vmem [shape: f32[1,128], index: 7, kind: input, shape index: {}]
  %s8 = inlined_call_operand.vmem [shape: f32[32,20], index: 8, kind: input, shape index: {}]
  %s9 = inlined_call_operand.vmem [shape: f32[1,20], index: 9, kind: input, shape index: {}]
  %s10 = inlined_call_operand.hbm [shape: f32[6,2,20], index: 10, kind: output, shape index: {0}]
  %s11 = inlined_call_operand.hbm [shape: f32[2,32], index: 11, kind: output, shape index: {1}]
  %s12 = inlined_call_operand.hbm [shape: f32[6,2,8], index: 12, kind: output, shape index: {2}]
  %13 = xla_tuple %s10, %s11, %s12
  %s14 = sld [smem:[#allocation0]]
  $region62: #{tpu_custom_call.1} parent=0
    _
  %s16 = ssub.s32 1, %s14
  %s17 = scalar_select 0, %s16, %s14
  %s18 = sshll.u32 %s0, 4
  %s19 = int_to_ptr.vmem [resolvable:$true] %s18
  %21 = dma.vmem_to_smem %s19, 16, [#allocation3], [#allocation2]
  %22 = dma.done [#allocation2], 16
  %23 = sfence
  $region1: #{tpu_custom_call.1} parent=0
    #allocation4 [shape = 'u8[6144]{0}', space=vmem, size = 0x1800, scoped, tag = 'output window, operand 0, single buffered']
    #allocation5 [shape = 's32[1]{0}', space=sflag, size = 0x4, scoped, tag = 'scoped memory for tpu_custom_call.1']
    #allocation6 [shape = 'u8[1024]{0}', space=vmem, size = 0x400, scoped, tag = 'output window, operand 1, single buffered']
    #allocation7 [shape = 's32[1]{0}', space=sflag, size = 0x4, scoped, tag = 'scoped memory for tpu_custom_call.1']
    #allocation8 [shape = 'u8[6144]{0}', space=vmem, size = 0x1800, scoped, tag = 'output window, operand 2, single buffered']
    %24 = vsyncpa [#allocation5], 0
    %25 = vsyncpa [#allocation7], 0
    // Predicated region
    $region2: #{tpu_custom_call.1} parent=1 // pred_check
      _
    $region3: #{tpu_custom_call.1} parent=1 // pred_check_branch
      %27 = sbr.rel (0) target = $region5
    $region4: #{tpu_custom_call.1} parent=1 // pred_region
      _
    $region5: #{tpu_custom_call.1} parent=1 // pred_fallthru
      _
    // Predicated region
    $region6: #{tpu_custom_call.1} parent=1 // pred_check
      _
    $region7: #{tpu_custom_call.1} parent=1 // pred_check_branch
      %29 = sbr.rel (0) target = $region9
    $region8: #{tpu_custom_call.1} parent=1 // pred_region
      _
    $region9: #{tpu_custom_call.1} parent=1 // pred_fallthru
      _
    // Predicated region
    $region10: #{tpu_custom_call.1} parent=1 // pred_check
      _
    $region11: #{tpu_custom_call.1} parent=1 // pred_check_branch
      %31 = sbr.rel (0) target = $region13
    $region12: #{tpu_custom_call.1} parent=1 // pred_region
      _
    $region13: #{tpu_custom_call.1} parent=1 // pred_fallthru
      _
    // Predicated region
    $region14: #{tpu_custom_call.1} parent=1 // pred_check
      _
    $region15: #{tpu_custom_call.1} parent=1 // pred_check_branch
      %33 = sbr.rel (0) target = $region17
    $region16: #{tpu_custom_call.1} parent=1 // pred_region
      _
    $region17: #{tpu_custom_call.1} parent=1 // pred_fallthru
      _
    // Predicated region
    $region18: #{tpu_custom_call.1} parent=1 // pred_check
      _
    $region19: #{tpu_custom_call.1} parent=1 // pred_check_branch
      %35 = sbr.rel (0) target = $region21
    $region20: #{tpu_custom_call.1} parent=1 // pred_region
      _
    $region21: #{tpu_custom_call.1} parent=1 // pred_fallthru
      _
    // Predicated region
    $region22: #{tpu_custom_call.1} parent=1 // pred_check
      _
    $region23: #{tpu_custom_call.1} parent=1 // pred_check_branch
      %37 = sbr.rel (0) target = $region25
    $region24: #{tpu_custom_call.1} parent=1 // pred_region
      _
    $region25: #{tpu_custom_call.1} parent=1 // pred_fallthru
      _
    // Predicated region
    $region26: #{tpu_custom_call.1} parent=1 // pred_check
      _
    $region27: #{tpu_custom_call.1} parent=1 // pred_check_branch
      %39 = sbr.rel (0) target = $region29
    $region28: #{tpu_custom_call.1} parent=1 // pred_region
      _
    $region29: #{tpu_custom_call.1} parent=1 // pred_fallthru
      _
    // Predicated region
    $region30: #{tpu_custom_call.1} parent=1 // pred_check
      _
    $region31: #{tpu_custom_call.1} parent=1 // pred_check_branch
      %41 = sbr.rel (0) target = $region33
    $region32: #{tpu_custom_call.1} parent=1 // pred_region
      _
    $region33: #{tpu_custom_call.1} parent=1 // pred_fallthru
      _
    // Predicated region
    $region34: #{tpu_custom_call.1} parent=1 // pred_check
      _
    $region35: #{tpu_custom_call.1} parent=1 // pred_check_branch
      %43 = sbr.rel (0) target = $region37
    $region36: #{tpu_custom_call.1} parent=1 // pred_region
      _
    $region37: #{tpu_custom_call.1} parent=1 // pred_fallthru
      _
    %v44 = vld [vmem:[%s2] sm:$0xff]
    %v45 = vld [vmem:[%s2 + $0x8] sm:$0xff]
    %v46 = vld [vmem:[%s4] sm:$0xff]
    %v47 = vld [vmem:[%s4 + $0x8] sm:$0xff]
    %v48 = vld [vmem:[%s4 + $0x10] sm:$0xff]
    %v49 = vld [vmem:[%s4 + $0x18] sm:$0xff]
    %v50 = vld [vmem:[%s4 + $0x20] sm:$0xff]
    %v51 = vld [vmem:[%s4 + $0x28] sm:$0xff]
    %v52 = vld [vmem:[%s5] sm:$0x1]
    %v53 = vld [vmem:[%s6] sm:$0xff]
    %v54 = vld [vmem:[%s6 + $0x8] sm:$0xff]
    %v55 = vld [vmem:[%s6 + $0x10] sm:$0xff]
    %v56 = vld [vmem:[%s6 + $0x18] sm:$0xff]
    %v57 = vld [vmem:[%s6 + $0x20] sm:$0xff]
    %v58 = vld [vmem:[%s6 + $0x28] sm:$0xff]
    %v59 = vld [vmem:[%s6 + $0x30] sm:$0xff]
    %v60 = vld [vmem:[%s6 + $0x38] sm:$0xff]
    %v61 = vld [vmem:[%s7] sm:$0x1]
    %v62 = vlaneseq
    %v63 = vand.u32 %v62, 127
    %s64 = sld [smem:[#allocation3]]
    %v65 = vstv %s64
    %vm66 = vcmp.eq.s32.totalorder %v63, %v65
    %v67 = vsel %vm66, 1, 0
    %v68 = vcvt.s32.f32 %v67
    %s69 = sld [smem:[#allocation3 + $0x1]]
    %v70 = vstv %s69
    %vm71 = vcmp.eq.s32.totalorder %v63, %v70
    %v72 = vsel %vm71, 1, 0
    %v73 = vcvt.s32.f32 %v72
    %s74 = sld [smem:[#allocation3 + $0x2]]
    %v75 = vstv %s74
    %vm76 = vcmp.eq.s32.totalorder %v63, %v75
    %v77 = vsel %vm76, 1, 0
    %v78 = vcvt.s32.f32 %v77
    %s79 = sld [smem:[#allocation3 + $0x3]]
    %v80 = vstv %s79
    %vm81 = vcmp.eq.s32.totalorder %v63, %v80
    %v82 = vsel %vm81, 1, 0
    %v83 = vcvt.s32.f32 %v82
    %s84 = sld [smem:[#allocation3 + $0x4]]
    %v85 = vstv %s84
    %vm86 = vcmp.eq.s32.totalorder %v63, %v85
    %v87 = vsel %vm86, 1, 0
    %v88 = vcvt.s32.f32 %v87
    %s89 = sld [smem:[#allocation3 + $0x5]]
    %v90 = vstv %s89
    %vm91 = vcmp.eq.s32.totalorder %v63, %v90
    %v92 = vsel %vm91, 1, 0
    %v93 = vcvt.s32.f32 %v92
    %s94 = sld [smem:[#allocation3 + $0x6]]
    %v95 = vstv %s94
    %vm96 = vcmp.eq.s32.totalorder %v63, %v95
    %v97 = vsel %vm96, 1, 0
    %v98 = vcvt.s32.f32 %v97
    %s99 = sld [smem:[#allocation3 + $0x7]]
    %v100 = vstv %s99
    %vm101 = vcmp.eq.s32.totalorder %v63, %v100
    %v102 = vsel %vm101, 1, 0
    %v103 = vcvt.s32.f32 %v102
    %s104 = sld [smem:[#allocation3 + $0x8]]
    %v105 = vstv %s104
    %vm106 = vcmp.eq.s32.totalorder %v63, %v105
    %v107 = vsel %vm106, 1, 0
    %v108 = vcvt.s32.f32 %v107
    %s109 = sld [smem:[#allocation3 + $0x9]]
    %v110 = vstv %s109
    %vm111 = vcmp.eq.s32.totalorder %v63, %v110
    %v112 = vsel %vm111, 1, 0
    %v113 = vcvt.s32.f32 %v112
    %s114 = sld [smem:[#allocation3 + $0xa]]
    %v115 = vstv %s114
    %vm116 = vcmp.eq.s32.totalorder %v63, %v115
    %v117 = vsel %vm116, 1, 0
    %v118 = vcvt.s32.f32 %v117
    %s119 = sld [smem:[#allocation3 + $0xb]]
    %v120 = vstv %s119
    %vm121 = vcmp.eq.s32.totalorder %v63, %v120
    %v122 = vsel %vm121, 1, 0
    %v123 = vcvt.s32.f32 %v122
    %vm124 = vcmask 1040384
    %v125 = vsel %vm124, %v68, %v73
    %vm126 = vcmask 1041408
    %v127 = vsel %vm126, %v125, %v78
    %vm128 = vcmask 1042432
    %v129 = vsel %vm128, %v127, %v83
    %vm130 = vcmask 1043456
    %v131 = vsel %vm130, %v129, %v88
    %vm132 = vcmask 1044480
    %v133 = vsel %vm132, %v131, %v93
    %vm134 = vcmask 1045504
    %v135 = vsel %vm134, %v133, %v98
    %vm136 = vcmask 1046528
    %v137 = vsel %vm136, %v135, %v103
    %v138 = vsel %vm124, %v108, %v113
    %v139 = vsel %vm126, %v138, %v118
    %v140 = vsel %vm128, %v139, %v123
    %v141 = vld [vmem:[%s3] sm:$0xff]
    %v142 = vld [vmem:[%s3 + $0x8] sm:$0xff]
    %v143 = vld [vmem:[%s3 + $0x10] sm:$0xf]
    %vm144 = vcmask 162816
    %v146 = vsel %vm144, %v137, 0
    %v149 = vsel %vm144, %v140, 0
    %v152 = vsel %vm130, %v143, 0
    %154 = vmatprep.subr.mxu0 0.0
    %155 = vmatpush1.msra.mxu0 %v141
    %156 = vmatprep.subr.mxu0 0.0
    %157 = vmatpush1.msra.mxu0 %v142
    %158 = vmatprep.subr.mxu0 0.0
    %159 = vmatpush1.msra.mxu0 %v152
    %160 = vmatprep.subr.mxu0 0.0
    %161 = vmatpush1.msra.mxu0 0.0
    %162 = vmatprep.subr.mxu0 0.0
    %163 = vmatpush1.msra.mxu0 0.0
    %164 = vmatprep.subr.mxu0 0.0
    %165 = vmatpush1.msra.mxu0 0.0
    %166 = vmatprep.subr.mxu0 0.0
    %167 = vmatpush1.msra.mxu0 0.0
    %168 = vmatprep.subr.mxu0 0.0
    %169 = vmatpush1.msra.mxu0 0.0
    %170 = vmatprep.subr.mxu0 0.0
    %171 = vmatpush1.msra.mxu0 0.0
    %172 = vmatprep.subr.mxu0 0.0
    %173 = vmatpush1.msra.mxu0 0.0
    %174 = vmatprep.subr.mxu0 0.0
    %175 = vmatpush1.msra.mxu0 0.0
    %176 = vmatprep.subr.mxu0 0.0
    %177 = vmatpush1.msra.mxu0 0.0
    %178 = vmatprep.subr.mxu0 0.0
    %179 = vmatpush1.msra.mxu0 0.0
    %180 = vmatprep.subr.mxu0 0.0
    %181 = vmatpush1.msra.mxu0 0.0
    %182 = vmatprep.subr.mxu0 0.0
    %183 = vmatpush1.msra.mxu0 0.0
    %184 = vmatprep.subr.mxu0 0.0
    %185 = vmatpush1.msra.mxu0 0.0
    %186 = vmatprep.subr.mxu0 0.0
    %187 = vmatpush1.msra.mxu0 0.0
    %188 = vmatprep.subr.mxu0 0.0
    %189 = vmatpush1.msra.mxu0 0.0
    %190 = vmatprep.subr.mxu0 0.0
    %191 = vmatpush1.msra.mxu0 0.0
    %192 = vmatprep.subr.mxu0 0.0
    %193 = vmatpush1.msra.mxu0 0.0
    %194 = vmatprep.subr.mxu0 0.0
    %195 = vmatpush1.msra.mxu0 0.0
    %196 = vmatprep.subr.mxu0 0.0
    %197 = vmatpush1.msra.mxu0 0.0
    %198 = vmatprep.subr.mxu0 0.0
    %199 = vmatpush1.msra.mxu0 0.0
    %200 = vmatprep.subr.mxu0 0.0
    %201 = vmatpush1.msra.mxu0 0.0
    %202 = vmatprep.subr.mxu0 0.0
    %203 = vmatpush1.msra.mxu0 0.0
    %204 = vmatprep.subr.mxu0 0.0
    %205 = vmatpush1.msra.mxu0 0.0
    %206 = vmatprep.subr.mxu0 0.0
    %207 = vmatpush1.msra.mxu0 0.0
    %208 = vmatprep.subr.mxu0 0.0
    %209 = vmatpush1.msra.mxu0 0.0
    %210 = vmatprep.subr.mxu0 0.0
    %211 = vmatpush1.msra.mxu0 0.0
    %212 = vmatprep.subr.mxu0 0.0
    %213 = vmatpush1.msra.mxu0 0.0
    %214 = vmatprep.subr.mxu0 0.0
    %215 = vmatpush1.msra.mxu0 0.0
    %216 = vmatprep.subr.mxu0 0.0
    %217 = vmatpush1.msra.mxu0 0.0
    %218 = vmatprep.mubr.f32.mxu0 0.0
    %219 = vmatmul.mubr.f32.gmra.mrb[0].mxu0 %v146
    %v220 = vpop.f32.mrb[0].mxu0
    %v221 = vadd.f32 0.0, %v220
    %v222 = vpop.f32.mrb[0].mxu0
    %223 = vmatprep.mubr.f32.mxu0 0.0
    %224 = vmatmul.mubr.f32.gmra.mrb[0].mxu0 %v149
    %v225 = vpop.f32.mrb[0].mxu0
    %v226 = vadd.f32 0.0, %v225
    %v227 = vpop.f32.mrb[0].mxu0
    %228 = vdwg.mxu0
    %v229 = vld [vmem:[%s1] sm:$0x3]
    %v232 = vunpack.c.l.s4 1966171168
    %v233 = vunpack.c.0.s8 %v232
    %v234 = vlaneseq
    %v235 = vshrl.u32 %v234, 7
    %v236 = vsub.s32 %v233, %v235
    %v237 = vrot.slane %v229, %v236
    %v238 = vcombine.high %v237, %v237
    %v240 = vunpack.c.l.s4 1966171168
    %v241 = vunpack.c.0.s8 %v240
    %v242 = vlaneseq
    %v243 = vshrl.u32 %v242, 7
    %v244 = vsub.s32 %v241, %v243
    %v245 = vrot.slane %v237, %v244
    %v247 = vunpack.c.l.s4 1966171168
    %v248 = vunpack.c.0.s8 %v247
    %v249 = vlaneseq
    %v250 = vshrl.u32 %v249, 7
    %v251 = vsub.s32 %v248, %v250
    %v252 = vrot.slane %v238, %v251
    %v253 = vlaneseq
    %v254 = vshrl.u32 %v253, 7
    %v255 = vsub.s32 0, %v254
    %v256 = vrot.slane %v245, %v255
    %v257 = vlaneseq
    %v258 = vshrl.u32 %v257, 7
    %v259 = vsub.s32 0, %v258
    %v260 = vrot.slane %v252, %v259
    %v263 = vmul.f32 %v44, %v256
    %v264 = vmul.f32 %v45, %v260
    %vm265 = vcmask 261120
    %v266 = vsel %vm265, %v263, 0.0
    %267 = vadd.xlane.f32.xlu0 %v266
    %v268 = vpop.xlane.xlu0 %267
    %v269 = vsel %vm265, %v264, 0.0
    %270 = vadd.xlane.f32.xlu0 %v269
    %v271 = vpop.xlane.xlu0 %270
    %v274 = vlaneseq
    %v275 = vshrl.u32 %v274, 7
    %v276 = vsub.s32 %v63, %v275
    %v277 = vrot.slane %v268, %v276
    %v278 = vlaneseq
    %v279 = vshrl.u32 %v278, 7
    %v280 = vsub.s32 %v63, %v279
    %v281 = vrot.slane %v271, %v280
    %vm282 = vcmask 1041409
    %v283 = vsel %vm282, %v281, %v277
    %vm285 = vcmask 58368
    %v286 = vsel %vm285, %v283, -inf
    %287 = vmax.xlane.f32.xlu0 %v286
    %v288 = vpop.xlane.xlu0 %287
    %v290 = vlaneseq
    %v291 = vshrl.u32 %v290, 7
    %v292 = vsub.s32 0, %v291
    %v293 = vrot.slane %v288, %v292
    %v294 = vlaneseq
    %v295 = vshrl.u32 %v294, 7
    %v296 = vsub.s32 1, %v295
    %v297 = vrot.slane %v288, %v296
    %v300 = vsub.f32 %v268, %v293
    %v301 = vsub.f32 %v271, %v297
    %v302 = vmul.f32 %v300, 1.442695
    %v303 = vpow.pop %v302
    %v304 = vmul.f32 %v301, 1.442695
    %v305 = vpow.pop %v304
    %308 = vset.pattern.permute.xlu0 0
    %309 = vperm.xlu0 %308, %v303
    %v310 = vpop.permute.xlu0 %309
    %311 = vset.pattern.permute.xlu0 0
    %312 = vperm.xlu0 %311, %v305
    %v313 = vpop.permute.xlu0 %312
    %v314 = vlaneseq
    %v315 = vshrl.u32 %v314, 7
    %v316 = vsub.s32 %v63, %v315
    %v317 = vrot.slane %v310, %v316
    %v318 = vlaneseq
    %v319 = vshrl.u32 %v318, 7
    %v320 = vsub.s32 %v63, %v319
    %v321 = vrot.slane %v313, %v320
    %v322 = vsel %vm282, %v321, %v317
    %v324 = vsel %vm285, %v322, 0.0
    %325 = vadd.xlane.f32.xlu0 %v324
    %v326 = vpop.xlane.xlu0 %325
    %v327 = vrcp.pop %v326
    %v329 = vlaneseq
    %v330 = vshrl.u32 %v329, 7
    %v331 = vsub.s32 0, %v330
    %v332 = vrot.slane %v327, %v331
    %v333 = vlaneseq
    %v334 = vshrl.u32 %v333, 7
    %v335 = vsub.s32 1, %v334
    %v336 = vrot.slane %v327, %v335
    %v339 = vmul.f32 %v303, %v332
    %v340 = vmul.f32 %v305, %v336
    %342 = vset.pattern.permute.xlu0 0
    %343 = vperm.xlu0 %342, %v339
    %v344 = vpop.permute.xlu0 %343
    %347 = vset.pattern.permute.xlu0 0
    %348 = vperm.xlu0 %347, %v340
    %v349 = vpop.permute.xlu0 %348
    %v351 = vmul.f32 %v44, %v344
    %v352 = vmul.f32 %v45, %v349
    %v353 = vsel %vm265, %v351, 0.0
    %v354 = vrot.slane %v353, 4
    %v355 = vadd.f32 %v353, %v354
    %v356 = vrot.slane %v355, 2
    %v357 = vadd.f32 %v355, %v356
    %v358 = vrot.slane %v357, 1
    %v359 = vadd.f32 %v357, %v358
    %v360 = vsel %vm265, %v352, 0.0
    %v361 = vrot.slane %v360, 4
    %v362 = vadd.f32 %v360, %v361
    %v363 = vrot.slane %v362, 2
    %v364 = vadd.f32 %v362, %v363
    %v365 = vrot.slane %v364, 1
    %v366 = vadd.f32 %v364, %v365
    %v369 = vsel %vm282, %v366, %v359
    %370 = vrot.lane.b32.xlu0 %v369, 16
    %v371 = vpop.permute.xlu0 %370
    %vm373 = vcmask 130048
    %v374 = vsel %vm373, %v221, %v371
    %v376 = vlaneseq
    %v377 = vshrl.u32 %v376, 7
    %v378 = vsub.s32 0, %v377
    %v379 = vrot.slane %v52, %v378
    %vm381 = vcmask 392192
    %v383 = vsel %vm381, %v374, 0
    %385 = vmatprep.subr.mxu0 0.0
    %386 = vmatpush1.msra.mxu0 %v46
    %387 = vmatprep.subr.mxu0 0.0
    %388 = vmatpush1.msra.mxu0 %v47
    %389 = vmatprep.subr.mxu0 0.0
    %390 = vmatpush1.msra.mxu0 %v48
    %391 = vmatprep.subr.mxu0 0.0
    %392 = vmatpush1.msra.mxu0 %v49
    %393 = vmatprep.subr.mxu0 0.0
    %394 = vmatpush1.msra.mxu0 %v50
    %395 = vmatprep.subr.mxu0 0.0
    %396 = vmatpush1.msra.mxu0 %v51
    %397 = vmatprep.subr.mxu0 0.0
    %398 = vmatpush1.msra.mxu0 0.0
    %399 = vmatprep.subr.mxu0 0.0
    %400 = vmatpush1.msra.mxu0 0.0
    %401 = vmatprep.subr.mxu0 0.0
    %402 = vmatpush1.msra.mxu0 0.0
    %403 = vmatprep.subr.mxu0 0.0
    %404 = vmatpush1.msra.mxu0 0.0
    %405 = vmatprep.subr.mxu0 0.0
    %406 = vmatpush1.msra.mxu0 0.0
    %407 = vmatprep.subr.mxu0 0.0
    %408 = vmatpush1.msra.mxu0 0.0
    %409 = vmatprep.subr.mxu0 0.0
    %410 = vmatpush1.msra.mxu0 0.0
    %411 = vmatprep.subr.mxu0 0.0
    %412 = vmatpush1.msra.mxu0 0.0
    %413 = vmatprep.subr.mxu0 0.0
    %414 = vmatpush1.msra.mxu0 0.0
    %415 = vmatprep.subr.mxu0 0.0
    %416 = vmatpush1.msra.mxu0 0.0
    %417 = vmatprep.subr.mxu0 0.0
    %418 = vmatpush1.msra.mxu0 0.0
    %419 = vmatprep.subr.mxu0 0.0
    %420 = vmatpush1.msra.mxu0 0.0
    %421 = vmatprep.subr.mxu0 0.0
    %422 = vmatpush1.msra.mxu0 0.0
    %423 = vmatprep.subr.mxu0 0.0
    %424 = vmatpush1.msra.mxu0 0.0
    %425 = vmatprep.subr.mxu0 0.0
    %426 = vmatpush1.msra.mxu0 0.0
    %427 = vmatprep.subr.mxu0 0.0
    %428 = vmatpush1.msra.mxu0 0.0
    %429 = vmatprep.subr.mxu0 0.0
    %430 = vmatpush1.msra.mxu0 0.0
    %431 = vmatprep.subr.mxu0 0.0
    %432 = vmatpush1.msra.mxu0 0.0
    %433 = vmatprep.subr.mxu0 0.0
    %434 = vmatpush1.msra.mxu0 0.0
    %435 = vmatprep.subr.mxu0 0.0
    %436 = vmatpush1.msra.mxu0 0.0
    %437 = vmatprep.subr.mxu0 0.0
    %438 = vmatpush1.msra.mxu0 0.0
    %439 = vmatprep.subr.mxu0 0.0
    %440 = vmatpush1.msra.mxu0 0.0
    %441 = vmatprep.subr.mxu0 0.0
    %442 = vmatpush1.msra.mxu0 0.0
    %443 = vmatprep.subr.mxu0 0.0
    %444 = vmatpush1.msra.mxu0 0.0
    %445 = vmatprep.subr.mxu0 0.0
    %446 = vmatpush1.msra.mxu0 0.0
    %447 = vmatprep.subr.mxu0 0.0
    %448 = vmatpush1.msra.mxu0 0.0
    %449 = vmatprep.mubr.f32.mxu0 0.0
    %450 = vmatmul.mubr.f32.gmra.mrb[0].mxu0 %v383
    %v451 = vpop.f32.mrb[0].mxu0
    %v452 = vadd.f32 %v379, %v451
    %v453 = vpop.f32.mrb[0].mxu0
    %454 = vdwg.mxu0
    %v455 = vtanh.pop %v452
    %456 = vrot.lane.b32.xlu0 %v229, 32
    %v457 = vpop.permute.xlu0 %456
    %v459 = vsel %vm265, %v455, %v457
    %v461 = vlaneseq
    %v462 = vshrl.u32 %v461, 7
    %v463 = vsub.s32 0, %v462
    %v464 = vrot.slane %v61, %v463
    %vm466 = vcmask 523264
    %v468 = vsel %vm466, %v459, 0
    %470 = vmatprep.subr.mxu0 0.0
    %471 = vmatpush1.msra.mxu0 %v53
    %472 = vmatprep.subr.mxu0 0.0
    %473 = vmatpush1.msra.mxu0 %v54
    %474 = vmatprep.subr.mxu0 0.0
    %475 = vmatpush1.msra.mxu0 %v55
    %476 = vmatprep.subr.mxu0 0.0
    %477 = vmatpush1.msra.mxu0 %v56
    %478 = vmatprep.subr.mxu0 0.0
    %479 = vmatpush1.msra.mxu0 %v57
    %480 = vmatprep.subr.mxu0 0.0
    %481 = vmatpush1.msra.mxu0 %v58
    %482 = vmatprep.subr.mxu0 0.0
    %483 = vmatpush1.msra.mxu0 %v59
    %484 = vmatprep.subr.mxu0 0.0
    %485 = vmatpush1.msra.mxu0 %v60
    %486 = vmatprep.subr.mxu0 0.0
    %487 = vmatpush1.msra.mxu0 0.0
    %488 = vmatprep.subr.mxu0 0.0
    %489 = vmatpush1.msra.mxu0 0.0
    %490 = vmatprep.subr.mxu0 0.0
    %491 = vmatpush1.msra.mxu0 0.0
    %492 = vmatprep.subr.mxu0 0.0
    %493 = vmatpush1.msra.mxu0 0.0
    %494 = vmatprep.subr.mxu0 0.0
    %495 = vmatpush1.msra.mxu0 0.0
    %496 = vmatprep.subr.mxu0 0.0
    %497 = vmatpush1.msra.mxu0 0.0
    %498 = vmatprep.subr.mxu0 0.0
    %499 = vmatpush1.msra.mxu0 0.0
    %500 = vmatprep.subr.mxu0 0.0
    %501 = vmatpush1.msra.mxu0 0.0
    %502 = vmatprep.subr.mxu0 0.0
    %503 = vmatpush1.msra.mxu0 0.0
    %504 = vmatprep.subr.mxu0 0.0
    %505 = vmatpush1.msra.mxu0 0.0
    %506 = vmatprep.subr.mxu0 0.0
    %507 = vmatpush1.msra.mxu0 0.0
    %508 = vmatprep.subr.mxu0 0.0
    %509 = vmatpush1.msra.mxu0 0.0
    %510 = vmatprep.subr.mxu0 0.0
    %511 = vmatpush1.msra.mxu0 0.0
    %512 = vmatprep.subr.mxu0 0.0
    %513 = vmatpush1.msra.mxu0 0.0
    %514 = vmatprep.subr.mxu0 0.0
    %515 = vmatpush1.msra.mxu0 0.0
    %516 = vmatprep.subr.mxu0 0.0
    %517 = vmatpush1.msra.mxu0 0.0
    %518 = vmatprep.subr.mxu0 0.0
    %519 = vmatpush1.msra.mxu0 0.0
    %520 = vmatprep.subr.mxu0 0.0
    %521 = vmatpush1.msra.mxu0 0.0
    %522 = vmatprep.subr.mxu0 0.0
    %523 = vmatpush1.msra.mxu0 0.0
    %524 = vmatprep.subr.mxu0 0.0
    %525 = vmatpush1.msra.mxu0 0.0
    %526 = vmatprep.subr.mxu0 0.0
    %527 = vmatpush1.msra.mxu0 0.0
    %528 = vmatprep.subr.mxu0 0.0
    %529 = vmatpush1.msra.mxu0 0.0
    %530 = vmatprep.subr.mxu0 0.0
    %531 = vmatpush1.msra.mxu0 0.0
    %532 = vmatprep.subr.mxu0 0.0
    %533 = vmatpush1.msra.mxu0 0.0
    %534 = vmatprep.mubr.f32.mxu0 0.0
    %535 = vmatmul.mubr.f32.gmra.mrb[0].mxu0 %v468
    %v536 = vpop.f32.mrb[0].mxu0
    %v537 = vadd.f32 %v464, %v536
    %v538 = vpop.f32.mrb[0].mxu0
    %539 = vdwg.mxu0
    %v540 = vxor.u32 %v537, 2147483648
    %v541 = vmul.f32 %v540, 1.442695
    %v542 = vpow.pop %v541
    %v543 = vadd.f32 %v542, 1.0
    %v544 = vrcp.pop %v543
    %v545 = vmul.f32 1.0, %v544
    %547 = vrot.lane.b32.xlu0 %v537, 32
    %v548 = vpop.permute.xlu0 %547
    %v550 = vmul.f32 %v545, %v548
    %552 = vrot.lane.b32.xlu0 %v550, 64
    %v553 = vpop.permute.xlu0 %552
    %v555 = vadd.f32 %v537, %v553
    %v556 = vtanh.pop %v555
    %v557 = vsub.f32 1.0, %v545
    %559 = vrot.lane.b32.xlu0 %v556, 96
    %v560 = vpop.permute.xlu0 %559
    %v562 = vmul.f32 %v557, %v560
    %v563 = vmul.f32 %v545, %v457
    %v564 = vadd.f32 %v562, %v563
    %v567 = vunpack.c.l.s4 1966171168
    %v568 = vunpack.c.0.s8 %v567
    %v569 = vlaneseq
    %v570 = vshrl.u32 %v569, 7
    %v571 = vsub.s32 %v568, %v570
    %v572 = vrot.slane %v564, %v571
    %v573 = vcombine.high %v572, %v572
    %v575 = vunpack.c.l.s4 1966171168
    %v576 = vunpack.c.0.s8 %v575
    %v577 = vlaneseq
    %v578 = vshrl.u32 %v577, 7
    %v579 = vsub.s32 %v576, %v578
    %v580 = vrot.slane %v572, %v579
    %v582 = vunpack.c.l.s4 1966171168
    %v583 = vunpack.c.0.s8 %v582
    %v584 = vlaneseq
    %v585 = vshrl.u32 %v584, 7
    %v586 = vsub.s32 %v583, %v585
    %v587 = vrot.slane %v573, %v586
    %v588 = vlaneseq
    %v589 = vshrl.u32 %v588, 7
    %v590 = vsub.s32 0, %v589
    %v591 = vrot.slane %v580, %v590
    %v592 = vlaneseq
    %v593 = vshrl.u32 %v592, 7
    %v594 = vsub.s32 0, %v593
    %v595 = vrot.slane %v587, %v594
    %596 = vrot.lane.b32.xlu0 %v591, 96
    %v597 = vpop.permute.xlu0 %596
    %598 = vrot.lane.b32.xlu0 %v595, 96
    %v599 = vpop.permute.xlu0 %598
    %v602 = vmul.f32 %v44, %v597
    %v603 = vmul.f32 %v45, %v599
    %v604 = vsel %vm265, %v602, 0.0
    %605 = vadd.xlane.f32.xlu0 %v604
    %v606 = vpop.xlane.xlu0 %605
    %v607 = vsel %vm265, %v603, 0.0
    %608 = vadd.xlane.f32.xlu0 %v607
    %v609 = vpop.xlane.xlu0 %608
    %v612 = vlaneseq
    %v613 = vshrl.u32 %v612, 7
    %v614 = vsub.s32 %v63, %v613
    %v615 = vrot.slane %v606, %v614
    %v616 = vlaneseq
    %v617 = vshrl.u32 %v616, 7
    %v618 = vsub.s32 %v63, %v617
    %v619 = vrot.slane %v609, %v618
    %v620 = vsel %vm282, %v619, %v615
    %v622 = vsel %vm285, %v620, -inf
    %623 = vmax.xlane.f32.xlu0 %v622
    %v624 = vpop.xlane.xlu0 %623
    %v626 = vlaneseq
    %v627 = vshrl.u32 %v626, 7
    %v628 = vsub.s32 0, %v627
    %v629 = vrot.slane %v624, %v628
    %v630 = vlaneseq
    %v631 = vshrl.u32 %v630, 7
    %v632 = vsub.s32 1, %v631
    %v633 = vrot.slane %v624, %v632
    %v636 = vsub.f32 %v606, %v629
    %v637 = vsub.f32 %v609, %v633
    %v638 = vmul.f32 %v636, 1.442695
    %v639 = vpow.pop %v638
    %v640 = vmul.f32 %v637, 1.442695
    %v641 = vpow.pop %v640
    %644 = vset.pattern.permute.xlu0 0
    %645 = vperm.xlu0 %644, %v639
    %v646 = vpop.permute.xlu0 %645
    %647 = vset.pattern.permute.xlu0 0
    %648 = vperm.xlu0 %647, %v641
    %v649 = vpop.permute.xlu0 %648
    %v650 = vlaneseq
    %v651 = vshrl.u32 %v650, 7
    %v652 = vsub.s32 %v63, %v651
    %v653 = vrot.slane %v646, %v652
    %v654 = vlaneseq
    %v655 = vshrl.u32 %v654, 7
    %v656 = vsub.s32 %v63, %v655
    %v657 = vrot.slane %v649, %v656
    %v658 = vsel %vm282, %v657, %v653
    %v660 = vsel %vm285, %v658, 0.0
    %661 = vadd.xlane.f32.xlu0 %v660
    %v662 = vpop.xlane.xlu0 %661
    %v663 = vrcp.pop %v662
    %v665 = vlaneseq
    %v666 = vshrl.u32 %v665, 7
    %v667 = vsub.s32 0, %v666
    %v668 = vrot.slane %v663, %v667
    %v669 = vlaneseq
    %v670 = vshrl.u32 %v669, 7
    %v671 = vsub.s32 1, %v670
    %v672 = vrot.slane %v663, %v671
    %v675 = vmul.f32 %v639, %v668
    %v676 = vmul.f32 %v641, %v672
    %678 = vset.pattern.permute.xlu0 0
    %679 = vperm.xlu0 %678, %v675
    %v680 = vpop.permute.xlu0 %679
    %683 = vset.pattern.permute.xlu0 0
    %684 = vperm.xlu0 %683, %v676
    %v685 = vpop.permute.xlu0 %684
    %v687 = vmul.f32 %v44, %v680
    %v688 = vmul.f32 %v45, %v685
    %v689 = vsel %vm265, %v687, 0.0
    %v690 = vrot.slane %v689, 4
    %v691 = vadd.f32 %v689, %v690
    %v692 = vrot.slane %v691, 2
    %v693 = vadd.f32 %v691, %v692
    %v694 = vrot.slane %v693, 1
    %v695 = vadd.f32 %v693, %v694
    %v696 = vsel %vm265, %v688, 0.0
    %v697 = vrot.slane %v696, 4
    %v698 = vadd.f32 %v696, %v697
    %v699 = vrot.slane %v698, 2
    %v700 = vadd.f32 %v698, %v699
    %v701 = vrot.slane %v700, 1
    %v702 = vadd.f32 %v700, %v701
    %vm705 = vcmask 1043459
    %v706 = vsel %vm705, %v702, %v695
    %707 = vrot.lane.b32.xlu0 %v706, 16
    %v708 = vpop.permute.xlu0 %707
    %v710 = vsel %vm373, %v221, %v708
    %v712 = vrot.slane %v710, 2
    %v713 = vsel %vm381, %v712, 0
    %715 = vmatprep.subr.mxu0 0.0
    %716 = vmatpush1.msra.mxu0 %v46
    %717 = vmatprep.subr.mxu0 0.0
    %718 = vmatpush1.msra.mxu0 %v47
    %719 = vmatprep.subr.mxu0 0.0
    %720 = vmatpush1.msra.mxu0 %v48
    %721 = vmatprep.subr.mxu0 0.0
    %722 = vmatpush1.msra.mxu0 %v49
    %723 = vmatprep.subr.mxu0 0.0
    %724 = vmatpush1.msra.mxu0 %v50
    %725 = vmatprep.subr.mxu0 0.0
    %726 = vmatpush1.msra.mxu0 %v51
    %727 = vmatprep.subr.mxu0 0.0
    %728 = vmatpush1.msra.mxu0 0.0
    %729 = vmatprep.subr.mxu0 0.0
    %730 = vmatpush1.msra.mxu0 0.0
    %731 = vmatprep.subr.mxu0 0.0
    %732 = vmatpush1.msra.mxu0 0.0
    %733 = vmatprep.subr.mxu0 0.0
    %734 = vmatpush1.msra.mxu0 0.0
    %735 = vmatprep.subr.mxu0 0.0
    %736 = vmatpush1.msra.mxu0 0.0
    %737 = vmatprep.subr.mxu0 0.0
    %738 = vmatpush1.msra.mxu0 0.0
    %739 = vmatprep.subr.mxu0 0.0
    %740 = vmatpush1.msra.mxu0 0.0
    %741 = vmatprep.subr.mxu0 0.0
    %742 = vmatpush1.msra.mxu0 0.0
    %743 = vmatprep.subr.mxu0 0.0
    %744 = vmatpush1.msra.mxu0 0.0
    %745 = vmatprep.subr.mxu0 0.0
    %746 = vmatpush1.msra.mxu0 0.0
    %747 = vmatprep.subr.mxu0 0.0
    %748 = vmatpush1.msra.mxu0 0.0
    %749 = vmatprep.subr.mxu0 0.0
    %750 = vmatpush1.msra.mxu0 0.0
    %751 = vmatprep.subr.mxu0 0.0
    %752 = vmatpush1.msra.mxu0 0.0
    %753 = vmatprep.subr.mxu0 0.0
    %754 = vmatpush1.msra.mxu0 0.0
    %755 = vmatprep.subr.mxu0 0.0
    %756 = vmatpush1.msra.mxu0 0.0
    %757 = vmatprep.subr.mxu0 0.0
    %758 = vmatpush1.msra.mxu0 0.0
    %759 = vmatprep.subr.mxu0 0.0
    %760 = vmatpush1.msra.mxu0 0.0
    %761 = vmatprep.subr.mxu0 0.0
    %762 = vmatpush1.msra.mxu0 0.0
    %763 = vmatprep.subr.mxu0 0.0
    %764 = vmatpush1.msra.mxu0 0.0
    %765 = vmatprep.subr.mxu0 0.0
    %766 = vmatpush1.msra.mxu0 0.0
    %767 = vmatprep.subr.mxu0 0.0
    %768 = vmatpush1.msra.mxu0 0.0
    %769 = vmatprep.subr.mxu0 0.0
    %770 = vmatpush1.msra.mxu0 0.0
    %771 = vmatprep.subr.mxu0 0.0
    %772 = vmatpush1.msra.mxu0 0.0
    %773 = vmatprep.subr.mxu0 0.0
    %774 = vmatpush1.msra.mxu0 0.0
    %775 = vmatprep.subr.mxu0 0.0
    %776 = vmatpush1.msra.mxu0 0.0
    %777 = vmatprep.subr.mxu0 0.0
    %778 = vmatpush1.msra.mxu0 0.0
    %779 = vmatprep.mubr.f32.mxu0 0.0
    %780 = vmatmul.mubr.f32.gmra.mrb[0].mxu0 %v713
    %v781 = vpop.f32.mrb[0].mxu0
    %v782 = vadd.f32 %v379, %v781
    %v783 = vpop.f32.mrb[0].mxu0
    %784 = vdwg.mxu0
    %v785 = vtanh.pop %v782
    %v786 = vsel %vm265, %v785, %v564
    %v788 = vsel %vm466, %v786, 0
    %790 = vmatprep.subr.mxu0 0.0
    %791 = vmatpush1.msra.mxu0 %v53
    %792 = vmatprep.subr.mxu0 0.0
    %793 = vmatpush1.msra.mxu0 %v54
    %794 = vmatprep.subr.mxu0 0.0
    %795 = vmatpush1.msra.mxu0 %v55
    %796 = vmatprep.subr.mxu0 0.0
    %797 = vmatpush1.msra.mxu0 %v56
    %798 = vmatprep.subr.mxu0 0.0
    %799 = vmatpush1.msra.mxu0 %v57
    %800 = vmatprep.subr.mxu0 0.0
    %801 = vmatpush1.msra.mxu0 %v58
    %802 = vmatprep.subr.mxu0 0.0
    %803 = vmatpush1.msra.mxu0 %v59
    %804 = vmatprep.subr.mxu0 0.0
    %805 = vmatpush1.msra.mxu0 %v60
    %806 = vmatprep.subr.mxu0 0.0
    %807 = vmatpush1.msra.mxu0 0.0
    %808 = vmatprep.subr.mxu0 0.0
    %809 = vmatpush1.msra.mxu0 0.0
    %810 = vmatprep.subr.mxu0 0.0
    %811 = vmatpush1.msra.mxu0 0.0
    %812 = vmatprep.subr.mxu0 0.0
    %813 = vmatpush1.msra.mxu0 0.0
    %814 = vmatprep.subr.mxu0 0.0
    %815 = vmatpush1.msra.mxu0 0.0
    %816 = vmatprep.subr.mxu0 0.0
    %817 = vmatpush1.msra.mxu0 0.0
    %818 = vmatprep.subr.mxu0 0.0
    %819 = vmatpush1.msra.mxu0 0.0
    %820 = vmatprep.subr.mxu0 0.0
    %821 = vmatpush1.msra.mxu0 0.0
    %822 = vmatprep.subr.mxu0 0.0
    %823 = vmatpush1.msra.mxu0 0.0
    %824 = vmatprep.subr.mxu0 0.0
    %825 = vmatpush1.msra.mxu0 0.0
    %826 = vmatprep.subr.mxu0 0.0
    %827 = vmatpush1.msra.mxu0 0.0
    %828 = vmatprep.subr.mxu0 0.0
    %829 = vmatpush1.msra.mxu0 0.0
    %830 = vmatprep.subr.mxu0 0.0
    %831 = vmatpush1.msra.mxu0 0.0
    %832 = vmatprep.subr.mxu0 0.0
    %833 = vmatpush1.msra.mxu0 0.0
    %834 = vmatprep.subr.mxu0 0.0
    %835 = vmatpush1.msra.mxu0 0.0
    %836 = vmatprep.subr.mxu0 0.0
    %837 = vmatpush1.msra.mxu0 0.0
    %838 = vmatprep.subr.mxu0 0.0
    %839 = vmatpush1.msra.mxu0 0.0
    %840 = vmatprep.subr.mxu0 0.0
    %841 = vmatpush1.msra.mxu0 0.0
    %842 = vmatprep.subr.mxu0 0.0
    %843 = vmatpush1.msra.mxu0 0.0
    %844 = vmatprep.subr.mxu0 0.0
    %845 = vmatpush1.msra.mxu0 0.0
    %846 = vmatprep.subr.mxu0 0.0
    %847 = vmatpush1.msra.mxu0 0.0
    %848 = vmatprep.subr.mxu0 0.0
    %849 = vmatpush1.msra.mxu0 0.0
    %850 = vmatprep.subr.mxu0 0.0
    %851 = vmatpush1.msra.mxu0 0.0
    %852 = vmatprep.subr.mxu0 0.0
    %853 = vmatpush1.msra.mxu0 0.0
    %854 = vmatprep.mubr.f32.mxu0 0.0
    %855 = vmatmul.mubr.f32.gmra.mrb[0].mxu0 %v788
    %v856 = vpop.f32.mrb[0].mxu0
    %v857 = vadd.f32 %v464, %v856
    %v858 = vpop.f32.mrb[0].mxu0
    %859 = vdwg.mxu0
    %v860 = vxor.u32 %v857, 2147483648
    %v861 = vmul.f32 %v860, 1.442695
    %v862 = vpow.pop %v861
    %v863 = vadd.f32 %v862, 1.0
    %v864 = vrcp.pop %v863
    %v865 = vmul.f32 1.0, %v864
    %867 = vrot.lane.b32.xlu0 %v857, 32
    %v868 = vpop.permute.xlu0 %867
    %v870 = vmul.f32 %v865, %v868
    %872 = vrot.lane.b32.xlu0 %v870, 64
    %v873 = vpop.permute.xlu0 %872
    %v875 = vadd.f32 %v857, %v873
    %v876 = vtanh.pop %v875
    %v877 = vsub.f32 1.0, %v865
    %879 = vrot.lane.b32.xlu0 %v876, 96
    %v880 = vpop.permute.xlu0 %879
    %v882 = vmul.f32 %v877, %v880
    %v883 = vmul.f32 %v865, %v564
    %v884 = vadd.f32 %v882, %v883
    %v887 = vunpack.c.l.s4 1966171168
    %v888 = vunpack.c.0.s8 %v887
    %v889 = vlaneseq
    %v890 = vshrl.u32 %v889, 7
    %v891 = vsub.s32 %v888, %v890
    %v892 = vrot.slane %v884, %v891
    %v893 = vcombine.high %v892, %v892
    %v895 = vunpack.c.l.s4 1966171168
    %v896 = vunpack.c.0.s8 %v895
    %v897 = vlaneseq
    %v898 = vshrl.u32 %v897, 7
    %v899 = vsub.s32 %v896, %v898
    %v900 = vrot.slane %v892, %v899
    %v902 = vunpack.c.l.s4 1966171168
    %v903 = vunpack.c.0.s8 %v902
    %v904 = vlaneseq
    %v905 = vshrl.u32 %v904, 7
    %v906 = vsub.s32 %v903, %v905
    %v907 = vrot.slane %v893, %v906
    %v908 = vlaneseq
    %v909 = vshrl.u32 %v908, 7
    %v910 = vsub.s32 0, %v909
    %v911 = vrot.slane %v900, %v910
    %v912 = vlaneseq
    %v913 = vshrl.u32 %v912, 7
    %v914 = vsub.s32 0, %v913
    %v915 = vrot.slane %v907, %v914
    %916 = vrot.lane.b32.xlu0 %v911, 96
    %v917 = vpop.permute.xlu0 %916
    %918 = vrot.lane.b32.xlu0 %v915, 96
    %v919 = vpop.permute.xlu0 %918
    %v922 = vmul.f32 %v44, %v917
    %v923 = vmul.f32 %v45, %v919
    %v924 = vsel %vm265, %v922, 0.0
    %925 = vadd.xlane.f32.xlu0 %v924
    %v926 = vpop.xlane.xlu0 %925
    %v927 = vsel %vm265, %v923, 0.0
    %928 = vadd.xlane.f32.xlu0 %v927
    %v929 = vpop.xlane.xlu0 %928
    %v932 = vlaneseq
    %v933 = vshrl.u32 %v932, 7
    %v934 = vsub.s32 %v63, %v933
    %v935 = vrot.slane %v926, %v934
    %v936 = vlaneseq
    %v937 = vshrl.u32 %v936, 7
    %v938 = vsub.s32 %v63, %v937
    %v939 = vrot.slane %v929, %v938
    %v940 = vsel %vm282, %v939, %v935
    %v942 = vsel %vm285, %v940, -inf
    %943 = vmax.xlane.f32.xlu0 %v942
    %v944 = vpop.xlane.xlu0 %943
    %v946 = vlaneseq
    %v947 = vshrl.u32 %v946, 7
    %v948 = vsub.s32 0, %v947
    %v949 = vrot.slane %v944, %v948
    %v950 = vlaneseq
    %v951 = vshrl.u32 %v950, 7
    %v952 = vsub.s32 1, %v951
    %v953 = vrot.slane %v944, %v952
    %v956 = vsub.f32 %v926, %v949
    %v957 = vsub.f32 %v929, %v953
    %v958 = vmul.f32 %v956, 1.442695
    %v959 = vpow.pop %v958
    %v960 = vmul.f32 %v957, 1.442695
    %v961 = vpow.pop %v960
    %964 = vset.pattern.permute.xlu0 0
    %965 = vperm.xlu0 %964, %v959
    %v966 = vpop.permute.xlu0 %965
    %967 = vset.pattern.permute.xlu0 0
    %968 = vperm.xlu0 %967, %v961
    %v969 = vpop.permute.xlu0 %968
    %v970 = vlaneseq
    %v971 = vshrl.u32 %v970, 7
    %v972 = vsub.s32 %v63, %v971
    %v973 = vrot.slane %v966, %v972
    %v974 = vlaneseq
    %v975 = vshrl.u32 %v974, 7
    %v976 = vsub.s32 %v63, %v975
    %v977 = vrot.slane %v969, %v976
    %v978 = vsel %vm282, %v977, %v973
    %v980 = vsel %vm285, %v978, 0.0
    %981 = vadd.xlane.f32.xlu0 %v980
    %v982 = vpop.xlane.xlu0 %981
    %v983 = vrcp.pop %v982
    %v985 = vlaneseq
    %v986 = vshrl.u32 %v985, 7
    %v987 = vsub.s32 0, %v986
    %v988 = vrot.slane %v983, %v987
    %v989 = vlaneseq
    %v990 = vshrl.u32 %v989, 7
    %v991 = vsub.s32 1, %v990
    %v992 = vrot.slane %v983, %v991
    %v995 = vmul.f32 %v959, %v988
    %v996 = vmul.f32 %v961, %v992
    %998 = vset.pattern.permute.xlu0 0
    %999 = vperm.xlu0 %998, %v995
    %v1000 = vpop.permute.xlu0 %999
    %1003 = vset.pattern.permute.xlu0 0
    %1004 = vperm.xlu0 %1003, %v996
    %v1005 = vpop.permute.xlu0 %1004
    %v1007 = vmul.f32 %v44, %v1000
    %v1008 = vmul.f32 %v45, %v1005
    %v1009 = vsel %vm265, %v1007, 0.0
    %v1010 = vrot.slane %v1009, 4
    %v1011 = vadd.f32 %v1009, %v1010
    %v1012 = vrot.slane %v1011, 2
    %v1013 = vadd.f32 %v1011, %v1012
    %v1014 = vrot.slane %v1013, 1
    %v1015 = vadd.f32 %v1013, %v1014
    %v1016 = vsel %vm265, %v1008, 0.0
    %v1017 = vrot.slane %v1016, 4
    %v1018 = vadd.f32 %v1016, %v1017
    %v1019 = vrot.slane %v1018, 2
    %v1020 = vadd.f32 %v1018, %v1019
    %v1021 = vrot.slane %v1020, 1
    %v1022 = vadd.f32 %v1020, %v1021
    %vm1025 = vcmask 1045509
    %v1026 = vsel %vm1025, %v1022, %v1015
    %1027 = vrot.lane.b32.xlu0 %v1026, 16
    %v1028 = vpop.permute.xlu0 %1027
    %v1030 = vsel %vm373, %v221, %v1028
    %v1032 = vrot.slane %v1030, 4
    %v1033 = vsel %vm381, %v1032, 0
    %1035 = vmatprep.subr.mxu0 0.0
    %1036 = vmatpush1.msra.mxu0 %v46
    %1037 = vmatprep.subr.mxu0 0.0
    %1038 = vmatpush1.msra.mxu0 %v47
    %1039 = vmatprep.subr.mxu0 0.0
    %1040 = vmatpush1.msra.mxu0 %v48
    %1041 = vmatprep.subr.mxu0 0.0
    %1042 = vmatpush1.msra.mxu0 %v49
    %1043 = vmatprep.subr.mxu0 0.0
    %1044 = vmatpush1.msra.mxu0 %v50
    %1045 = vmatprep.subr.mxu0 0.0
    %1046 = vmatpush1.msra.mxu0 %v51
    %1047 = vmatprep.subr.mxu0 0.0
    %1048 = vmatpush1.msra.mxu0 0.0
    %1049 = vmatprep.subr.mxu0 0.0
    %1050 = vmatpush1.msra.mxu0 0.0
    %1051 = vmatprep.subr.mxu0 0.0
    %1052 = vmatpush1.msra.mxu0 0.0
    %1053 = vmatprep.subr.mxu0 0.0
    %1054 = vmatpush1.msra.mxu0 0.0
    %1055 = vmatprep.subr.mxu0 0.0
    %1056 = vmatpush1.msra.mxu0 0.0
    %1057 = vmatprep.subr.mxu0 0.0
    %1058 = vmatpush1.msra.mxu0 0.0
    %1059 = vmatprep.subr.mxu0 0.0
    %1060 = vmatpush1.msra.mxu0 0.0
    %1061 = vmatprep.subr.mxu0 0.0
    %1062 = vmatpush1.msra.mxu0 0.0
    %1063 = vmatprep.subr.mxu0 0.0
    %1064 = vmatpush1.msra.mxu0 0.0
    %1065 = vmatprep.subr.mxu0 0.0
    %1066 = vmatpush1.msra.mxu0 0.0
    %1067 = vmatprep.subr.mxu0 0.0
    %1068 = vmatpush1.msra.mxu0 0.0
    %1069 = vmatprep.subr.mxu0 0.0
    %1070 = vmatpush1.msra.mxu0 0.0
    %1071 = vmatprep.subr.mxu0 0.0
    %1072 = vmatpush1.msra.mxu0 0.0
    %1073 = vmatprep.subr.mxu0 0.0
    %1074 = vmatpush1.msra.mxu0 0.0
    %1075 = vmatprep.subr.mxu0 0.0
    %1076 = vmatpush1.msra.mxu0 0.0
    %1077 = vmatprep.subr.mxu0 0.0
    %1078 = vmatpush1.msra.mxu0 0.0
    %1079 = vmatprep.subr.mxu0 0.0
    %1080 = vmatpush1.msra.mxu0 0.0
    %1081 = vmatprep.subr.mxu0 0.0
    %1082 = vmatpush1.msra.mxu0 0.0
    %1083 = vmatprep.subr.mxu0 0.0
    %1084 = vmatpush1.msra.mxu0 0.0
    %1085 = vmatprep.subr.mxu0 0.0
    %1086 = vmatpush1.msra.mxu0 0.0
    %1087 = vmatprep.subr.mxu0 0.0
    %1088 = vmatpush1.msra.mxu0 0.0
    %1089 = vmatprep.subr.mxu0 0.0
    %1090 = vmatpush1.msra.mxu0 0.0
    %1091 = vmatprep.subr.mxu0 0.0
    %1092 = vmatpush1.msra.mxu0 0.0
    %1093 = vmatprep.subr.mxu0 0.0
    %1094 = vmatpush1.msra.mxu0 0.0
    %1095 = vmatprep.subr.mxu0 0.0
    %1096 = vmatpush1.msra.mxu0 0.0
    %1097 = vmatprep.subr.mxu0 0.0
    %1098 = vmatpush1.msra.mxu0 0.0
    %1099 = vmatprep.mubr.f32.mxu0 0.0
    %1100 = vmatmul.mubr.f32.gmra.mrb[0].mxu0 %v1033
    %v1101 = vpop.f32.mrb[0].mxu0
    %v1102 = vadd.f32 %v379, %v1101
    %v1103 = vpop.f32.mrb[0].mxu0
    %1104 = vdwg.mxu0
    %v1105 = vtanh.pop %v1102
    %v1106 = vsel %vm265, %v1105, %v884
    %v1108 = vsel %vm466, %v1106, 0
    %1110 = vmatprep.subr.mxu0 0.0
    %1111 = vmatpush1.msra.mxu0 %v53
    %1112 = vmatprep.subr.mxu0 0.0
    %1113 = vmatpush1.msra.mxu0 %v54
    %1114 = vmatprep.subr.mxu0 0.0
    %1115 = vmatpush1.msra.mxu0 %v55
    %1116 = vmatprep.subr.mxu0 0.0
    %1117 = vmatpush1.msra.mxu0 %v56
    %1118 = vmatprep.subr.mxu0 0.0
    %1119 = vmatpush1.msra.mxu0 %v57
    %1120 = vmatprep.subr.mxu0 0.0
    %1121 = vmatpush1.msra.mxu0 %v58
    %1122 = vmatprep.subr.mxu0 0.0
    %1123 = vmatpush1.msra.mxu0 %v59
    %1124 = vmatprep.subr.mxu0 0.0
    %1125 = vmatpush1.msra.mxu0 %v60
    %1126 = vmatprep.subr.mxu0 0.0
    %1127 = vmatpush1.msra.mxu0 0.0
    %1128 = vmatprep.subr.mxu0 0.0
    %1129 = vmatpush1.msra.mxu0 0.0
    %1130 = vmatprep.subr.mxu0 0.0
    %1131 = vmatpush1.msra.mxu0 0.0
    %1132 = vmatprep.subr.mxu0 0.0
    %1133 = vmatpush1.msra.mxu0 0.0
    %1134 = vmatprep.subr.mxu0 0.0
    %1135 = vmatpush1.msra.mxu0 0.0
    %1136 = vmatprep.subr.mxu0 0.0
    %1137 = vmatpush1.msra.mxu0 0.0
    %1138 = vmatprep.subr.mxu0 0.0
    %1139 = vmatpush1.msra.mxu0 0.0
    %1140 = vmatprep.subr.mxu0 0.0
    %1141 = vmatpush1.msra.mxu0 0.0
    %1142 = vmatprep.subr.mxu0 0.0
    %1143 = vmatpush1.msra.mxu0 0.0
    %1144 = vmatprep.subr.mxu0 0.0
    %1145 = vmatpush1.msra.mxu0 0.0
    %1146 = vmatprep.subr.mxu0 0.0
    %1147 = vmatpush1.msra.mxu0 0.0
    %1148 = vmatprep.subr.mxu0 0.0
    %1149 = vmatpush1.msra.mxu0 0.0
    %1150 = vmatprep.subr.mxu0 0.0
    %1151 = vmatpush1.msra.mxu0 0.0
    %1152 = vmatprep.subr.mxu0 0.0
    %1153 = vmatpush1.msra.mxu0 0.0
    %1154 = vmatprep.subr.mxu0 0.0
    %1155 = vmatpush1.msra.mxu0 0.0
    %1156 = vmatprep.subr.mxu0 0.0
    %1157 = vmatpush1.msra.mxu0 0.0
    %1158 = vmatprep.subr.mxu0 0.0
    %1159 = vmatpush1.msra.mxu0 0.0
    %1160 = vmatprep.subr.mxu0 0.0
    %1161 = vmatpush1.msra.mxu0 0.0
    %1162 = vmatprep.subr.mxu0 0.0
    %1163 = vmatpush1.msra.mxu0 0.0
    %1164 = vmatprep.subr.mxu0 0.0
    %1165 = vmatpush1.msra.mxu0 0.0
    %1166 = vmatprep.subr.mxu0 0.0
    %1167 = vmatpush1.msra.mxu0 0.0
    %1168 = vmatprep.subr.mxu0 0.0
    %1169 = vmatpush1.msra.mxu0 0.0
    %1170 = vmatprep.subr.mxu0 0.0
    %1171 = vmatpush1.msra.mxu0 0.0
    %1172 = vmatprep.subr.mxu0 0.0
    %1173 = vmatpush1.msra.mxu0 0.0
    %1174 = vmatprep.mubr.f32.mxu0 0.0
    %1175 = vmatmul.mubr.f32.gmra.mrb[0].mxu0 %v1108
    %v1176 = vpop.f32.mrb[0].mxu0
    %v1177 = vadd.f32 %v464, %v1176
    %v1178 = vpop.f32.mrb[0].mxu0
    %1179 = vdwg.mxu0
    %v1180 = vxor.u32 %v1177, 2147483648
    %v1181 = vmul.f32 %v1180, 1.442695
    %v1182 = vpow.pop %v1181
    %v1183 = vadd.f32 %v1182, 1.0
    %v1184 = vrcp.pop %v1183
    %v1185 = vmul.f32 1.0, %v1184
    %1187 = vrot.lane.b32.xlu0 %v1177, 32
    %v1188 = vpop.permute.xlu0 %1187
    %v1190 = vmul.f32 %v1185, %v1188
    %1192 = vrot.lane.b32.xlu0 %v1190, 64
    %v1193 = vpop.permute.xlu0 %1192
    %v1195 = vadd.f32 %v1177, %v1193
    %v1196 = vtanh.pop %v1195
    %v1197 = vsub.f32 1.0, %v1185
    %1199 = vrot.lane.b32.xlu0 %v1196, 96
    %v1200 = vpop.permute.xlu0 %1199
    %v1202 = vmul.f32 %v1197, %v1200
    %v1203 = vmul.f32 %v1185, %v884
    %v1204 = vadd.f32 %v1202, %v1203
    %v1207 = vunpack.c.l.s4 1966171168
    %v1208 = vunpack.c.0.s8 %v1207
    %v1209 = vlaneseq
    %v1210 = vshrl.u32 %v1209, 7
    %v1211 = vsub.s32 %v1208, %v1210
    %v1212 = vrot.slane %v1204, %v1211
    %v1213 = vcombine.high %v1212, %v1212
    %v1215 = vunpack.c.l.s4 1966171168
    %v1216 = vunpack.c.0.s8 %v1215
    %v1217 = vlaneseq
    %v1218 = vshrl.u32 %v1217, 7
    %v1219 = vsub.s32 %v1216, %v1218
    %v1220 = vrot.slane %v1212, %v1219
    %v1222 = vunpack.c.l.s4 1966171168
    %v1223 = vunpack.c.0.s8 %v1222
    %v1224 = vlaneseq
    %v1225 = vshrl.u32 %v1224, 7
    %v1226 = vsub.s32 %v1223, %v1225
    %v1227 = vrot.slane %v1213, %v1226
    %v1228 = vlaneseq
    %v1229 = vshrl.u32 %v1228, 7
    %v1230 = vsub.s32 0, %v1229
    %v1231 = vrot.slane %v1220, %v1230
    %v1232 = vlaneseq
    %v1233 = vshrl.u32 %v1232, 7
    %v1234 = vsub.s32 0, %v1233
    %v1235 = vrot.slane %v1227, %v1234
    %1236 = vrot.lane.b32.xlu0 %v1231, 96
    %v1237 = vpop.permute.xlu0 %1236
    %1238 = vrot.lane.b32.xlu0 %v1235, 96
    %v1239 = vpop.permute.xlu0 %1238
    %v1242 = vmul.f32 %v44, %v1237
    %v1243 = vmul.f32 %v45, %v1239
    %v1244 = vsel %vm265, %v1242, 0.0
    %1245 = vadd.xlane.f32.xlu0 %v1244
    %v1246 = vpop.xlane.xlu0 %1245
    %v1247 = vsel %vm265, %v1243, 0.0
    %1248 = vadd.xlane.f32.xlu0 %v1247
    %v1249 = vpop.xlane.xlu0 %1248
    %v1252 = vlaneseq
    %v1253 = vshrl.u32 %v1252, 7
    %v1254 = vsub.s32 %v63, %v1253
    %v1255 = vrot.slane %v1246, %v1254
    %v1256 = vlaneseq
    %v1257 = vshrl.u32 %v1256, 7
    %v1258 = vsub.s32 %v63, %v1257
    %v1259 = vrot.slane %v1249, %v1258
    %v1260 = vsel %vm282, %v1259, %v1255
    %v1262 = vsel %vm285, %v1260, -inf
    %1263 = vmax.xlane.f32.xlu0 %v1262
    %v1264 = vpop.xlane.xlu0 %1263
    %v1266 = vlaneseq
    %v1267 = vshrl.u32 %v1266, 7
    %v1268 = vsub.s32 0, %v1267
    %v1269 = vrot.slane %v1264, %v1268
    %v1270 = vlaneseq
    %v1271 = vshrl.u32 %v1270, 7
    %v1272 = vsub.s32 1, %v1271
    %v1273 = vrot.slane %v1264, %v1272
    %v1276 = vsub.f32 %v1246, %v1269
    %v1277 = vsub.f32 %v1249, %v1273
    %v1278 = vmul.f32 %v1276, 1.442695
    %v1279 = vpow.pop %v1278
    %v1280 = vmul.f32 %v1277, 1.442695
    %v1281 = vpow.pop %v1280
    %1284 = vset.pattern.permute.xlu0 0
    %1285 = vperm.xlu0 %1284, %v1279
    %v1286 = vpop.permute.xlu0 %1285
    %1287 = vset.pattern.permute.xlu0 0
    %1288 = vperm.xlu0 %1287, %v1281
    %v1289 = vpop.permute.xlu0 %1288
    %v1290 = vlaneseq
    %v1291 = vshrl.u32 %v1290, 7
    %v1292 = vsub.s32 %v63, %v1291
    %v1293 = vrot.slane %v1286, %v1292
    %v1294 = vlaneseq
    %v1295 = vshrl.u32 %v1294, 7
    %v1296 = vsub.s32 %v63, %v1295
    %v1297 = vrot.slane %v1289, %v1296
    %v1298 = vsel %vm282, %v1297, %v1293
    %v1300 = vsel %vm285, %v1298, 0.0
    %1301 = vadd.xlane.f32.xlu0 %v1300
    %v1302 = vpop.xlane.xlu0 %1301
    %v1303 = vrcp.pop %v1302
    %v1305 = vlaneseq
    %v1306 = vshrl.u32 %v1305, 7
    %v1307 = vsub.s32 0, %v1306
    %v1308 = vrot.slane %v1303, %v1307
    %v1309 = vlaneseq
    %v1310 = vshrl.u32 %v1309, 7
    %v1311 = vsub.s32 1, %v1310
    %v1312 = vrot.slane %v1303, %v1311
    %v1315 = vmul.f32 %v1279, %v1308
    %v1316 = vmul.f32 %v1281, %v1312
    %1318 = vset.pattern.permute.xlu0 0
    %1319 = vperm.xlu0 %1318, %v1315
    %v1320 = vpop.permute.xlu0 %1319
    %1323 = vset.pattern.permute.xlu0 0
    %1324 = vperm.xlu0 %1323, %v1316
    %v1325 = vpop.permute.xlu0 %1324
    %v1327 = vmul.f32 %v44, %v1320
    %v1328 = vmul.f32 %v45, %v1325
    %v1329 = vsel %vm265, %v1327, 0.0
    %v1330 = vrot.slane %v1329, 4
    %v1331 = vadd.f32 %v1329, %v1330
    %v1332 = vrot.slane %v1331, 2
    %v1333 = vadd.f32 %v1331, %v1332
    %v1334 = vrot.slane %v1333, 1
    %v1335 = vadd.f32 %v1333, %v1334
    %v1336 = vsel %vm265, %v1328, 0.0
    %v1337 = vrot.slane %v1336, 4
    %v1338 = vadd.f32 %v1336, %v1337
    %v1339 = vrot.slane %v1338, 2
    %v1340 = vadd.f32 %v1338, %v1339
    %v1341 = vrot.slane %v1340, 1
    %v1342 = vadd.f32 %v1340, %v1341
    %vm1345 = vcmask 1047559
    %v1346 = vsel %vm1345, %v1342, %v1335
    %1347 = vrot.lane.b32.xlu0 %v1346, 16
    %v1348 = vpop.permute.xlu0 %1347
    %v1350 = vsel %vm373, %v221, %v1348
    %v1352 = vrot.slane %v1350, 6
    %v1353 = vsel %vm381, %v1352, 0
    %1355 = vmatprep.subr.mxu0 0.0
    %1356 = vmatpush1.msra.mxu0 %v46
    %1357 = vmatprep.subr.mxu0 0.0
    %1358 = vmatpush1.msra.mxu0 %v47
    %1359 = vmatprep.subr.mxu0 0.0
    %1360 = vmatpush1.msra.mxu0 %v48
    %1361 = vmatprep.subr.mxu0 0.0
    %1362 = vmatpush1.msra.mxu0 %v49
    %1363 = vmatprep.subr.mxu0 0.0
    %1364 = vmatpush1.msra.mxu0 %v50
    %1365 = vmatprep.subr.mxu0 0.0
    %1366 = vmatpush1.msra.mxu0 %v51
    %1367 = vmatprep.subr.mxu0 0.0
    %1368 = vmatpush1.msra.mxu0 0.0
    %1369 = vmatprep.subr.mxu0 0.0
    %1370 = vmatpush1.msra.mxu0 0.0
    %1371 = vmatprep.subr.mxu0 0.0
    %1372 = vmatpush1.msra.mxu0 0.0
    %1373 = vmatprep.subr.mxu0 0.0
    %1374 = vmatpush1.msra.mxu0 0.0
    %1375 = vmatprep.subr.mxu0 0.0
    %1376 = vmatpush1.msra.mxu0 0.0
    %1377 = vmatprep.subr.mxu0 0.0
    %1378 = vmatpush1.msra.mxu0 0.0
    %1379 = vmatprep.subr.mxu0 0.0
    %1380 = vmatpush1.msra.mxu0 0.0
    %1381 = vmatprep.subr.mxu0 0.0
    %1382 = vmatpush1.msra.mxu0 0.0
    %1383 = vmatprep.subr.mxu0 0.0
    %1384 = vmatpush1.msra.mxu0 0.0
    %1385 = vmatprep.subr.mxu0 0.0
    %1386 = vmatpush1.msra.mxu0 0.0
    %1387 = vmatprep.subr.mxu0 0.0
    %1388 = vmatpush1.msra.mxu0 0.0
    %1389 = vmatprep.subr.mxu0 0.0
    %1390 = vmatpush1.msra.mxu0 0.0
    %1391 = vmatprep.subr.mxu0 0.0
    %1392 = vmatpush1.msra.mxu0 0.0
    %1393 = vmatprep.subr.mxu0 0.0
    %1394 = vmatpush1.msra.mxu0 0.0
    %1395 = vmatprep.subr.mxu0 0.0
    %1396 = vmatpush1.msra.mxu0 0.0
    %1397 = vmatprep.subr.mxu0 0.0
    %1398 = vmatpush1.msra.mxu0 0.0
    %1399 = vmatprep.subr.mxu0 0.0
    %1400 = vmatpush1.msra.mxu0 0.0
    %1401 = vmatprep.subr.mxu0 0.0
    %1402 = vmatpush1.msra.mxu0 0.0
    %1403 = vmatprep.subr.mxu0 0.0
    %1404 = vmatpush1.msra.mxu0 0.0
    %1405 = vmatprep.subr.mxu0 0.0
    %1406 = vmatpush1.msra.mxu0 0.0
    %1407 = vmatprep.subr.mxu0 0.0
    %1408 = vmatpush1.msra.mxu0 0.0
    %1409 = vmatprep.subr.mxu0 0.0
    %1410 = vmatpush1.msra.mxu0 0.0
    %1411 = vmatprep.subr.mxu0 0.0
    %1412 = vmatpush1.msra.mxu0 0.0
    %1413 = vmatprep.subr.mxu0 0.0
    %1414 = vmatpush1.msra.mxu0 0.0
    %1415 = vmatprep.subr.mxu0 0.0
    %1416 = vmatpush1.msra.mxu0 0.0
    %1417 = vmatprep.subr.mxu0 0.0
    %1418 = vmatpush1.msra.mxu0 0.0
    %1419 = vmatprep.mubr.f32.mxu0 0.0
    %1420 = vmatmul.mubr.f32.gmra.mrb[0].mxu0 %v1353
    %v1421 = vpop.f32.mrb[0].mxu0
    %v1422 = vadd.f32 %v379, %v1421
    %v1423 = vpop.f32.mrb[0].mxu0
    %1424 = vdwg.mxu0
    %v1425 = vtanh.pop %v1422
    %v1426 = vsel %vm265, %v1425, %v1204
    %v1428 = vsel %vm466, %v1426, 0
    %1430 = vmatprep.subr.mxu0 0.0
    %1431 = vmatpush1.msra.mxu0 %v53
    %1432 = vmatprep.subr.mxu0 0.0
    %1433 = vmatpush1.msra.mxu0 %v54
    %1434 = vmatprep.subr.mxu0 0.0
    %1435 = vmatpush1.msra.mxu0 %v55
    %1436 = vmatprep.subr.mxu0 0.0
    %1437 = vmatpush1.msra.mxu0 %v56
    %1438 = vmatprep.subr.mxu0 0.0
    %1439 = vmatpush1.msra.mxu0 %v57
    %1440 = vmatprep.subr.mxu0 0.0
    %1441 = vmatpush1.msra.mxu0 %v58
    %1442 = vmatprep.subr.mxu0 0.0
    %1443 = vmatpush1.msra.mxu0 %v59
    %1444 = vmatprep.subr.mxu0 0.0
    %1445 = vmatpush1.msra.mxu0 %v60
    %1446 = vmatprep.subr.mxu0 0.0
    %1447 = vmatpush1.msra.mxu0 0.0
    %1448 = vmatprep.subr.mxu0 0.0
    %1449 = vmatpush1.msra.mxu0 0.0
    %1450 = vmatprep.subr.mxu0 0.0
    %1451 = vmatpush1.msra.mxu0 0.0
    %1452 = vmatprep.subr.mxu0 0.0
    %1453 = vmatpush1.msra.mxu0 0.0
    %1454 = vmatprep.subr.mxu0 0.0
    %1455 = vmatpush1.msra.mxu0 0.0
    %1456 = vmatprep.subr.mxu0 0.0
    %1457 = vmatpush1.msra.mxu0 0.0
    %1458 = vmatprep.subr.mxu0 0.0
    %1459 = vmatpush1.msra.mxu0 0.0
    %1460 = vmatprep.subr.mxu0 0.0
    %1461 = vmatpush1.msra.mxu0 0.0
    %1462 = vmatprep.subr.mxu0 0.0
    %1463 = vmatpush1.msra.mxu0 0.0
    %1464 = vmatprep.subr.mxu0 0.0
    %1465 = vmatpush1.msra.mxu0 0.0
    %1466 = vmatprep.subr.mxu0 0.0
    %1467 = vmatpush1.msra.mxu0 0.0
    %1468 = vmatprep.subr.mxu0 0.0
    %1469 = vmatpush1.msra.mxu0 0.0
    %1470 = vmatprep.subr.mxu0 0.0
    %1471 = vmatpush1.msra.mxu0 0.0
    %1472 = vmatprep.subr.mxu0 0.0
    %1473 = vmatpush1.msra.mxu0 0.0
    %1474 = vmatprep.subr.mxu0 0.0
    %1475 = vmatpush1.msra.mxu0 0.0
    %1476 = vmatprep.subr.mxu0 0.0
    %1477 = vmatpush1.msra.mxu0 0.0
    %1478 = vmatprep.subr.mxu0 0.0
    %1479 = vmatpush1.msra.mxu0 0.0
    %1480 = vmatprep.subr.mxu0 0.0
    %1481 = vmatpush1.msra.mxu0 0.0
    %1482 = vmatprep.subr.mxu0 0.0
    %1483 = vmatpush1.msra.mxu0 0.0
    %1484 = vmatprep.subr.mxu0 0.0
    %1485 = vmatpush1.msra.mxu0 0.0
    %1486 = vmatprep.subr.mxu0 0.0
    %1487 = vmatpush1.msra.mxu0 0.0
    %1488 = vmatprep.subr.mxu0 0.0
    %1489 = vmatpush1.msra.mxu0 0.0
    %1490 = vmatprep.subr.mxu0 0.0
    %1491 = vmatpush1.msra.mxu0 0.0
    %1492 = vmatprep.subr.mxu0 0.0
    %1493 = vmatpush1.msra.mxu0 0.0
    %1494 = vmatprep.mubr.f32.mxu0 0.0
    %1495 = vmatmul.mubr.f32.gmra.mrb[0].mxu0 %v1428
    %v1496 = vpop.f32.mrb[0].mxu0
    %v1497 = vadd.f32 %v464, %v1496
    %v1498 = vpop.f32.mrb[0].mxu0
    %1499 = vdwg.mxu0
    %v1500 = vxor.u32 %v1497, 2147483648
    %v1501 = vmul.f32 %v1500, 1.442695
    %v1502 = vpow.pop %v1501
    %v1503 = vadd.f32 %v1502, 1.0
    %v1504 = vrcp.pop %v1503
    %v1505 = vmul.f32 1.0, %v1504
    %1507 = vrot.lane.b32.xlu0 %v1497, 32
    %v1508 = vpop.permute.xlu0 %1507
    %v1510 = vmul.f32 %v1505, %v1508
    %1512 = vrot.lane.b32.xlu0 %v1510, 64
    %v1513 = vpop.permute.xlu0 %1512
    %v1515 = vadd.f32 %v1497, %v1513
    %v1516 = vtanh.pop %v1515
    %v1517 = vsub.f32 1.0, %v1505
    %1519 = vrot.lane.b32.xlu0 %v1516, 96
    %v1520 = vpop.permute.xlu0 %1519
    %v1522 = vmul.f32 %v1517, %v1520
    %v1523 = vmul.f32 %v1505, %v1204
    %v1524 = vadd.f32 %v1522, %v1523
    %v1527 = vunpack.c.l.s4 1966171168
    %v1528 = vunpack.c.0.s8 %v1527
    %v1529 = vlaneseq
    %v1530 = vshrl.u32 %v1529, 7
    %v1531 = vsub.s32 %v1528, %v1530
    %v1532 = vrot.slane %v1524, %v1531
    %v1533 = vcombine.high %v1532, %v1532
    %v1535 = vunpack.c.l.s4 1966171168
    %v1536 = vunpack.c.0.s8 %v1535
    %v1537 = vlaneseq
    %v1538 = vshrl.u32 %v1537, 7
    %v1539 = vsub.s32 %v1536, %v1538
    %v1540 = vrot.slane %v1532, %v1539
    %v1542 = vunpack.c.l.s4 1966171168
    %v1543 = vunpack.c.0.s8 %v1542
    %v1544 = vlaneseq
    %v1545 = vshrl.u32 %v1544, 7
    %v1546 = vsub.s32 %v1543, %v1545
    %v1547 = vrot.slane %v1533, %v1546
    %v1548 = vlaneseq
    %v1549 = vshrl.u32 %v1548, 7
    %v1550 = vsub.s32 0, %v1549
    %v1551 = vrot.slane %v1540, %v1550
    %v1552 = vlaneseq
    %v1553 = vshrl.u32 %v1552, 7
    %v1554 = vsub.s32 0, %v1553
    %v1555 = vrot.slane %v1547, %v1554
    %1556 = vrot.lane.b32.xlu0 %v1551, 96
    %v1557 = vpop.permute.xlu0 %1556
    %1558 = vrot.lane.b32.xlu0 %v1555, 96
    %v1559 = vpop.permute.xlu0 %1558
    %v1562 = vmul.f32 %v44, %v1557
    %v1563 = vmul.f32 %v45, %v1559
    %v1564 = vsel %vm265, %v1562, 0.0
    %1565 = vadd.xlane.f32.xlu0 %v1564
    %v1566 = vpop.xlane.xlu0 %1565
    %v1567 = vsel %vm265, %v1563, 0.0
    %1568 = vadd.xlane.f32.xlu0 %v1567
    %v1569 = vpop.xlane.xlu0 %1568
    %v1572 = vlaneseq
    %v1573 = vshrl.u32 %v1572, 7
    %v1574 = vsub.s32 %v63, %v1573
    %v1575 = vrot.slane %v1566, %v1574
    %v1576 = vlaneseq
    %v1577 = vshrl.u32 %v1576, 7
    %v1578 = vsub.s32 %v63, %v1577
    %v1579 = vrot.slane %v1569, %v1578
    %v1580 = vsel %vm282, %v1579, %v1575
    %v1582 = vsel %vm285, %v1580, -inf
    %1583 = vmax.xlane.f32.xlu0 %v1582
    %v1584 = vpop.xlane.xlu0 %1583
    %v1586 = vlaneseq
    %v1587 = vshrl.u32 %v1586, 7
    %v1588 = vsub.s32 0, %v1587
    %v1589 = vrot.slane %v1584, %v1588
    %v1590 = vlaneseq
    %v1591 = vshrl.u32 %v1590, 7
    %v1592 = vsub.s32 1, %v1591
    %v1593 = vrot.slane %v1584, %v1592
    %v1596 = vsub.f32 %v1566, %v1589
    %v1597 = vsub.f32 %v1569, %v1593
    %v1598 = vmul.f32 %v1596, 1.442695
    %v1599 = vpow.pop %v1598
    %v1600 = vmul.f32 %v1597, 1.442695
    %v1601 = vpow.pop %v1600
    %1604 = vset.pattern.permute.xlu0 0
    %1605 = vperm.xlu0 %1604, %v1599
    %v1606 = vpop.permute.xlu0 %1605
    %1607 = vset.pattern.permute.xlu0 0
    %1608 = vperm.xlu0 %1607, %v1601
    %v1609 = vpop.permute.xlu0 %1608
    %v1610 = vlaneseq
    %v1611 = vshrl.u32 %v1610, 7
    %v1612 = vsub.s32 %v63, %v1611
    %v1613 = vrot.slane %v1606, %v1612
    %v1614 = vlaneseq
    %v1615 = vshrl.u32 %v1614, 7
    %v1616 = vsub.s32 %v63, %v1615
    %v1617 = vrot.slane %v1609, %v1616
    %v1618 = vsel %vm282, %v1617, %v1613
    %v1620 = vsel %vm285, %v1618, 0.0
    %1621 = vadd.xlane.f32.xlu0 %v1620
    %v1622 = vpop.xlane.xlu0 %1621
    %v1623 = vrcp.pop %v1622
    %v1625 = vlaneseq
    %v1626 = vshrl.u32 %v1625, 7
    %v1627 = vsub.s32 0, %v1626
    %v1628 = vrot.slane %v1623, %v1627
    %v1629 = vlaneseq
    %v1630 = vshrl.u32 %v1629, 7
    %v1631 = vsub.s32 1, %v1630
    %v1632 = vrot.slane %v1623, %v1631
    %v1635 = vmul.f32 %v1599, %v1628
    %v1636 = vmul.f32 %v1601, %v1632
    %1638 = vset.pattern.permute.xlu0 0
    %1639 = vperm.xlu0 %1638, %v1635
    %v1640 = vpop.permute.xlu0 %1639
    %1643 = vset.pattern.permute.xlu0 0
    %1644 = vperm.xlu0 %1643, %v1636
    %v1645 = vpop.permute.xlu0 %1644
    %v1647 = vmul.f32 %v44, %v1640
    %v1648 = vmul.f32 %v45, %v1645
    %v1649 = vsel %vm265, %v1647, 0.0
    %v1650 = vrot.slane %v1649, 4
    %v1651 = vadd.f32 %v1649, %v1650
    %v1652 = vrot.slane %v1651, 2
    %v1653 = vadd.f32 %v1651, %v1652
    %v1654 = vrot.slane %v1653, 1
    %v1655 = vadd.f32 %v1653, %v1654
    %v1656 = vsel %vm265, %v1648, 0.0
    %v1657 = vrot.slane %v1656, 4
    %v1658 = vadd.f32 %v1656, %v1657
    %v1659 = vrot.slane %v1658, 2
    %v1660 = vadd.f32 %v1658, %v1659
    %v1661 = vrot.slane %v1660, 1
    %v1662 = vadd.f32 %v1660, %v1661
    %v1665 = vsel %vm282, %v1662, %v1655
    %1666 = vrot.lane.b32.xlu0 %v1665, 16
    %v1667 = vpop.permute.xlu0 %1666
    %v1669 = vsel %vm373, %v226, %v1667
    %v1671 = vsel %vm381, %v1669, 0
    %1673 = vmatprep.subr.mxu0 0.0
    %1674 = vmatpush1.msra.mxu0 %v46
    %1675 = vmatprep.subr.mxu0 0.0
    %1676 = vmatpush1.msra.mxu0 %v47
    %1677 = vmatprep.subr.mxu0 0.0
    %1678 = vmatpush1.msra.mxu0 %v48
    %1679 = vmatprep.subr.mxu0 0.0
    %1680 = vmatpush1.msra.mxu0 %v49
    %1681 = vmatprep.subr.mxu0 0.0
    %1682 = vmatpush1.msra.mxu0 %v50
    %1683 = vmatprep.subr.mxu0 0.0
    %1684 = vmatpush1.msra.mxu0 %v51
    %1685 = vmatprep.subr.mxu0 0.0
    %1686 = vmatpush1.msra.mxu0 0.0
    %1687 = vmatprep.subr.mxu0 0.0
    %1688 = vmatpush1.msra.mxu0 0.0
    %1689 = vmatprep.subr.mxu0 0.0
    %1690 = vmatpush1.msra.mxu0 0.0
    %1691 = vmatprep.subr.mxu0 0.0
    %1692 = vmatpush1.msra.mxu0 0.0
    %1693 = vmatprep.subr.mxu0 0.0
    %1694 = vmatpush1.msra.mxu0 0.0
    %1695 = vmatprep.subr.mxu0 0.0
    %1696 = vmatpush1.msra.mxu0 0.0
    %1697 = vmatprep.subr.mxu0 0.0
    %1698 = vmatpush1.msra.mxu0 0.0
    %1699 = vmatprep.subr.mxu0 0.0
    %1700 = vmatpush1.msra.mxu0 0.0
    %1701 = vmatprep.subr.mxu0 0.0
    %1702 = vmatpush1.msra.mxu0 0.0
    %1703 = vmatprep.subr.mxu0 0.0
    %1704 = vmatpush1.msra.mxu0 0.0
    %1705 = vmatprep.subr.mxu0 0.0
    %1706 = vmatpush1.msra.mxu0 0.0
    %1707 = vmatprep.subr.mxu0 0.0
    %1708 = vmatpush1.msra.mxu0 0.0
    %1709 = vmatprep.subr.mxu0 0.0
    %1710 = vmatpush1.msra.mxu0 0.0
    %1711 = vmatprep.subr.mxu0 0.0
    %1712 = vmatpush1.msra.mxu0 0.0
    %1713 = vmatprep.subr.mxu0 0.0
    %1714 = vmatpush1.msra.mxu0 0.0
    %1715 = vmatprep.subr.mxu0 0.0
    %1716 = vmatpush1.msra.mxu0 0.0
    %1717 = vmatprep.subr.mxu0 0.0
    %1718 = vmatpush1.msra.mxu0 0.0
    %1719 = vmatprep.subr.mxu0 0.0
    %1720 = vmatpush1.msra.mxu0 0.0
    %1721 = vmatprep.subr.mxu0 0.0
    %1722 = vmatpush1.msra.mxu0 0.0
    %1723 = vmatprep.subr.mxu0 0.0
    %1724 = vmatpush1.msra.mxu0 0.0
    %1725 = vmatprep.subr.mxu0 0.0
    %1726 = vmatpush1.msra.mxu0 0.0
    %1727 = vmatprep.subr.mxu0 0.0
    %1728 = vmatpush1.msra.mxu0 0.0
    %1729 = vmatprep.subr.mxu0 0.0
    %1730 = vmatpush1.msra.mxu0 0.0
    %1731 = vmatprep.subr.mxu0 0.0
    %1732 = vmatpush1.msra.mxu0 0.0
    %1733 = vmatprep.subr.mxu0 0.0
    %1734 = vmatpush1.msra.mxu0 0.0
    %1735 = vmatprep.subr.mxu0 0.0
    %1736 = vmatpush1.msra.mxu0 0.0
    %1737 = vmatprep.mubr.f32.mxu0 0.0
    %1738 = vmatmul.mubr.f32.gmra.mrb[0].mxu0 %v1671
    %v1739 = vpop.f32.mrb[0].mxu0
    %v1740 = vadd.f32 %v379, %v1739
    %v1741 = vpop.f32.mrb[0].mxu0
    %1742 = vdwg.mxu0
    %v1743 = vtanh.pop %v1740
    %v1744 = vsel %vm265, %v1743, %v1524
    %v1746 = vsel %vm466, %v1744, 0
    %1748 = vmatprep.subr.mxu0 0.0
    %1749 = vmatpush1.msra.mxu0 %v53
    %1750 = vmatprep.subr.mxu0 0.0
    %1751 = vmatpush1.msra.mxu0 %v54
    %1752 = vmatprep.subr.mxu0 0.0
    %1753 = vmatpush1.msra.mxu0 %v55
    %1754 = vmatprep.subr.mxu0 0.0
    %1755 = vmatpush1.msra.mxu0 %v56
    %1756 = vmatprep.subr.mxu0 0.0
    %1757 = vmatpush1.msra.mxu0 %v57
    %1758 = vmatprep.subr.mxu0 0.0
    %1759 = vmatpush1.msra.mxu0 %v58
    %1760 = vmatprep.subr.mxu0 0.0
    %1761 = vmatpush1.msra.mxu0 %v59
    %1762 = vmatprep.subr.mxu0 0.0
    %1763 = vmatpush1.msra.mxu0 %v60
    %1764 = vmatprep.subr.mxu0 0.0
    %1765 = vmatpush1.msra.mxu0 0.0
    %1766 = vmatprep.subr.mxu0 0.0
    %1767 = vmatpush1.msra.mxu0 0.0
    %1768 = vmatprep.subr.mxu0 0.0
    %1769 = vmatpush1.msra.mxu0 0.0
    %1770 = vmatprep.subr.mxu0 0.0
    %1771 = vmatpush1.msra.mxu0 0.0
    %1772 = vmatprep.subr.mxu0 0.0
    %1773 = vmatpush1.msra.mxu0 0.0
    %1774 = vmatprep.subr.mxu0 0.0
    %1775 = vmatpush1.msra.mxu0 0.0
    %1776 = vmatprep.subr.mxu0 0.0
    %1777 = vmatpush1.msra.mxu0 0.0
    %1778 = vmatprep.subr.mxu0 0.0
    %1779 = vmatpush1.msra.mxu0 0.0
    %1780 = vmatprep.subr.mxu0 0.0
    %1781 = vmatpush1.msra.mxu0 0.0
    %1782 = vmatprep.subr.mxu0 0.0
    %1783 = vmatpush1.msra.mxu0 0.0
    %1784 = vmatprep.subr.mxu0 0.0
    %1785 = vmatpush1.msra.mxu0 0.0
    %1786 = vmatprep.subr.mxu0 0.0
    %1787 = vmatpush1.msra.mxu0 0.0
    %1788 = vmatprep.subr.mxu0 0.0
    %1789 = vmatpush1.msra.mxu0 0.0
    %1790 = vmatprep.subr.mxu0 0.0
    %1791 = vmatpush1.msra.mxu0 0.0
    %1792 = vmatprep.subr.mxu0 0.0
    %1793 = vmatpush1.msra.mxu0 0.0
    %1794 = vmatprep.subr.mxu0 0.0
    %1795 = vmatpush1.msra.mxu0 0.0
    %1796 = vmatprep.subr.mxu0 0.0
    %1797 = vmatpush1.msra.mxu0 0.0
    %1798 = vmatprep.subr.mxu0 0.0
    %1799 = vmatpush1.msra.mxu0 0.0
    %1800 = vmatprep.subr.mxu0 0.0
    %1801 = vmatpush1.msra.mxu0 0.0
    %1802 = vmatprep.subr.mxu0 0.0
    %1803 = vmatpush1.msra.mxu0 0.0
    %1804 = vmatprep.subr.mxu0 0.0
    %1805 = vmatpush1.msra.mxu0 0.0
    %1806 = vmatprep.subr.mxu0 0.0
    %1807 = vmatpush1.msra.mxu0 0.0
    %1808 = vmatprep.subr.mxu0 0.0
    %1809 = vmatpush1.msra.mxu0 0.0
    %1810 = vmatprep.subr.mxu0 0.0
    %1811 = vmatpush1.msra.mxu0 0.0
    %1812 = vmatprep.mubr.f32.mxu0 0.0
    %1813 = vmatmul.mubr.f32.gmra.mrb[0].mxu0 %v1746
    %v1814 = vpop.f32.mrb[0].mxu0
    %v1815 = vadd.f32 %v464, %v1814
    %v1816 = vpop.f32.mrb[0].mxu0
    %1817 = vdwg.mxu0
    %v1818 = vxor.u32 %v1815, 2147483648
    %v1819 = vmul.f32 %v1818, 1.442695
    %v1820 = vpow.pop %v1819
    %v1821 = vadd.f32 %v1820, 1.0
    %v1822 = vrcp.pop %v1821
    %v1823 = vmul.f32 1.0, %v1822
    %1825 = vrot.lane.b32.xlu0 %v1815, 32
    %v1826 = vpop.permute.xlu0 %1825
    %v1828 = vmul.f32 %v1823, %v1826
    %1830 = vrot.lane.b32.xlu0 %v1828, 64
    %v1831 = vpop.permute.xlu0 %1830
    %v1833 = vadd.f32 %v1815, %v1831
    %v1834 = vtanh.pop %v1833
    %v1835 = vsub.f32 1.0, %v1823
    %1837 = vrot.lane.b32.xlu0 %v1834, 96
    %v1838 = vpop.permute.xlu0 %1837
    %v1840 = vmul.f32 %v1835, %v1838
    %v1841 = vmul.f32 %v1823, %v1524
    %v1842 = vadd.f32 %v1840, %v1841
    %v1845 = vunpack.c.l.s4 1966171168
    %v1846 = vunpack.c.0.s8 %v1845
    %v1847 = vlaneseq
    %v1848 = vshrl.u32 %v1847, 7
    %v1849 = vsub.s32 %v1846, %v1848
    %v1850 = vrot.slane %v1842, %v1849
    %v1851 = vcombine.high %v1850, %v1850
    %v1853 = vunpack.c.l.s4 1966171168
    %v1854 = vunpack.c.0.s8 %v1853
    %v1855 = vlaneseq
    %v1856 = vshrl.u32 %v1855, 7
    %v1857 = vsub.s32 %v1854, %v1856
    %v1858 = vrot.slane %v1850, %v1857
    %v1860 = vunpack.c.l.s4 1966171168
    %v1861 = vunpack.c.0.s8 %v1860
    %v1862 = vlaneseq
    %v1863 = vshrl.u32 %v1862, 7
    %v1864 = vsub.s32 %v1861, %v1863
    %v1865 = vrot.slane %v1851, %v1864
    %v1866 = vlaneseq
    %v1867 = vshrl.u32 %v1866, 7
    %v1868 = vsub.s32 0, %v1867
    %v1869 = vrot.slane %v1858, %v1868
    %v1870 = vlaneseq
    %v1871 = vshrl.u32 %v1870, 7
    %v1872 = vsub.s32 0, %v1871
    %v1873 = vrot.slane %v1865, %v1872
    %1874 = vrot.lane.b32.xlu0 %v1869, 96
    %v1875 = vpop.permute.xlu0 %1874
    %1876 = vrot.lane.b32.xlu0 %v1873, 96
    %v1877 = vpop.permute.xlu0 %1876
    %v1880 = vmul.f32 %v44, %v1875
    %v1881 = vmul.f32 %v45, %v1877
    %v1882 = vsel %vm265, %v1880, 0.0
    %1883 = vadd.xlane.f32.xlu0 %v1882
    %v1884 = vpop.xlane.xlu0 %1883
    %v1885 = vsel %vm265, %v1881, 0.0
    %1886 = vadd.xlane.f32.xlu0 %v1885
    %v1887 = vpop.xlane.xlu0 %1886
    %v1890 = vlaneseq
    %v1891 = vshrl.u32 %v1890, 7
    %v1892 = vsub.s32 %v63, %v1891
    %v1893 = vrot.slane %v1884, %v1892
    %v1894 = vlaneseq
    %v1895 = vshrl.u32 %v1894, 7
    %v1896 = vsub.s32 %v63, %v1895
    %v1897 = vrot.slane %v1887, %v1896
    %v1898 = vsel %vm282, %v1897, %v1893
    %v1900 = vsel %vm285, %v1898, -inf
    %1901 = vmax.xlane.f32.xlu0 %v1900
    %v1902 = vpop.xlane.xlu0 %1901
    %v1904 = vlaneseq
    %v1905 = vshrl.u32 %v1904, 7
    %v1906 = vsub.s32 0, %v1905
    %v1907 = vrot.slane %v1902, %v1906
    %v1908 = vlaneseq
    %v1909 = vshrl.u32 %v1908, 7
    %v1910 = vsub.s32 1, %v1909
    %v1911 = vrot.slane %v1902, %v1910
    %v1914 = vsub.f32 %v1884, %v1907
    %v1915 = vsub.f32 %v1887, %v1911
    %v1916 = vmul.f32 %v1914, 1.442695
    %v1917 = vpow.pop %v1916
    %v1918 = vmul.f32 %v1915, 1.442695
    %v1919 = vpow.pop %v1918
    %1922 = vset.pattern.permute.xlu0 0
    %1923 = vperm.xlu0 %1922, %v1917
    %v1924 = vpop.permute.xlu0 %1923
    %1925 = vset.pattern.permute.xlu0 0
    %1926 = vperm.xlu0 %1925, %v1919
    %v1927 = vpop.permute.xlu0 %1926
    %v1928 = vlaneseq
    %v1929 = vshrl.u32 %v1928, 7
    %v1930 = vsub.s32 %v63, %v1929
    %v1931 = vrot.slane %v1924, %v1930
    %v1932 = vlaneseq
    %v1933 = vshrl.u32 %v1932, 7
    %v1934 = vsub.s32 %v63, %v1933
    %v1935 = vrot.slane %v1927, %v1934
    %v1936 = vsel %vm282, %v1935, %v1931
    %v1938 = vsel %vm285, %v1936, 0.0
    %1939 = vadd.xlane.f32.xlu0 %v1938
    %v1940 = vpop.xlane.xlu0 %1939
    %v1941 = vrcp.pop %v1940
    %v1943 = vlaneseq
    %v1944 = vshrl.u32 %v1943, 7
    %v1945 = vsub.s32 0, %v1944
    %v1946 = vrot.slane %v1941, %v1945
    %v1947 = vlaneseq
    %v1948 = vshrl.u32 %v1947, 7
    %v1949 = vsub.s32 1, %v1948
    %v1950 = vrot.slane %v1941, %v1949
    %v1953 = vmul.f32 %v1917, %v1946
    %v1954 = vmul.f32 %v1919, %v1950
    %1956 = vset.pattern.permute.xlu0 0
    %1957 = vperm.xlu0 %1956, %v1953
    %v1958 = vpop.permute.xlu0 %1957
    %1961 = vset.pattern.permute.xlu0 0
    %1962 = vperm.xlu0 %1961, %v1954
    %v1963 = vpop.permute.xlu0 %1962
    %v1965 = vmul.f32 %v44, %v1958
    %v1966 = vmul.f32 %v45, %v1963
    %v1967 = vsel %vm265, %v1965, 0.0
    %v1968 = vrot.slane %v1967, 4
    %v1969 = vadd.f32 %v1967, %v1968
    %v1970 = vrot.slane %v1969, 2
    %v1971 = vadd.f32 %v1969, %v1970
    %v1972 = vrot.slane %v1971, 1
    %v1973 = vadd.f32 %v1971, %v1972
    %v1974 = vsel %vm265, %v1966, 0.0
    %v1975 = vrot.slane %v1974, 4
    %v1976 = vadd.f32 %v1974, %v1975
    %v1977 = vrot.slane %v1976, 2
    %v1978 = vadd.f32 %v1976, %v1977
    %v1979 = vrot.slane %v1978, 1
    %v1980 = vadd.f32 %v1978, %v1979
    %v1983 = vsel %vm705, %v1980, %v1973
    %1984 = vrot.lane.b32.xlu0 %v1983, 16
    %v1985 = vpop.permute.xlu0 %1984
    %v1987 = vsel %vm373, %v226, %v1985
    %v1989 = vrot.slane %v1987, 2
    %v1990 = vsel %vm381, %v1989, 0
    %1992 = vmatprep.subr.mxu0 0.0
    %1993 = vmatpush1.msra.mxu0 %v46
    %1994 = vmatprep.subr.mxu0 0.0
    %1995 = vmatpush1.msra.mxu0 %v47
    %1996 = vmatprep.subr.mxu0 0.0
    %1997 = vmatpush1.msra.mxu0 %v48
    %1998 = vmatprep.subr.mxu0 0.0
    %1999 = vmatpush1.msra.mxu0 %v49
    %2000 = vmatprep.subr.mxu0 0.0
    %2001 = vmatpush1.msra.mxu0 %v50
    %2002 = vmatprep.subr.mxu0 0.0
    %2003 = vmatpush1.msra.mxu0 %v51
    %2004 = vmatprep.subr.mxu0 0.0
    %2005 = vmatpush1.msra.mxu0 0.0
    %2006 = vmatprep.subr.mxu0 0.0
    %2007 = vmatpush1.msra.mxu0 0.0
    %2008 = vmatprep.subr.mxu0 0.0
    %2009 = vmatpush1.msra.mxu0 0.0
    %2010 = vmatprep.subr.mxu0 0.0
    %2011 = vmatpush1.msra.mxu0 0.0
    %2012 = vmatprep.subr.mxu0 0.0
    %2013 = vmatpush1.msra.mxu0 0.0
    %2014 = vmatprep.subr.mxu0 0.0
    %2015 = vmatpush1.msra.mxu0 0.0
    %2016 = vmatprep.subr.mxu0 0.0
    %2017 = vmatpush1.msra.mxu0 0.0
    %2018 = vmatprep.subr.mxu0 0.0
    %2019 = vmatpush1.msra.mxu0 0.0
    %2020 = vmatprep.subr.mxu0 0.0
    %2021 = vmatpush1.msra.mxu0 0.0
    %2022 = vmatprep.subr.mxu0 0.0
    %2023 = vmatpush1.msra.mxu0 0.0
    %2024 = vmatprep.subr.mxu0 0.0
    %2025 = vmatpush1.msra.mxu0 0.0
    %2026 = vmatprep.subr.mxu0 0.0
    %2027 = vmatpush1.msra.mxu0 0.0
    %2028 = vmatprep.subr.mxu0 0.0
    %2029 = vmatpush1.msra.mxu0 0.0
    %2030 = vmatprep.subr.mxu0 0.0
    %2031 = vmatpush1.msra.mxu0 0.0
    %2032 = vmatprep.subr.mxu0 0.0
    %2033 = vmatpush1.msra.mxu0 0.0
    %2034 = vmatprep.subr.mxu0 0.0
    %2035 = vmatpush1.msra.mxu0 0.0
    %2036 = vmatprep.subr.mxu0 0.0
    %2037 = vmatpush1.msra.mxu0 0.0
    %2038 = vmatprep.subr.mxu0 0.0
    %2039 = vmatpush1.msra.mxu0 0.0
    %2040 = vmatprep.subr.mxu0 0.0
    %2041 = vmatpush1.msra.mxu0 0.0
    %2042 = vmatprep.subr.mxu0 0.0
    %2043 = vmatpush1.msra.mxu0 0.0
    %2044 = vmatprep.subr.mxu0 0.0
    %2045 = vmatpush1.msra.mxu0 0.0
    %2046 = vmatprep.subr.mxu0 0.0
    %2047 = vmatpush1.msra.mxu0 0.0
    %2048 = vmatprep.subr.mxu0 0.0
    %2049 = vmatpush1.msra.mxu0 0.0
    %2050 = vmatprep.subr.mxu0 0.0
    %2051 = vmatpush1.msra.mxu0 0.0
    %2052 = vmatprep.subr.mxu0 0.0
    %2053 = vmatpush1.msra.mxu0 0.0
    %2054 = vmatprep.subr.mxu0 0.0
    %2055 = vmatpush1.msra.mxu0 0.0
    %2056 = vmatprep.mubr.f32.mxu0 0.0
    %2057 = vmatmul.mubr.f32.gmra.mrb[0].mxu0 %v1990
    %v2058 = vpop.f32.mrb[0].mxu0
    %v2059 = vadd.f32 %v379, %v2058
    %v2060 = vpop.f32.mrb[0].mxu0
    %2061 = vdwg.mxu0
    %v2062 = vtanh.pop %v2059
    %v2063 = vsel %vm265, %v2062, %v1842
    %v2065 = vsel %vm466, %v2063, 0
    %2067 = vmatprep.subr.mxu0 0.0
    %2068 = vmatpush1.msra.mxu0 %v53
    %2069 = vmatprep.subr.mxu0 0.0
    %2070 = vmatpush1.msra.mxu0 %v54
    %2071 = vmatprep.subr.mxu0 0.0
    %2072 = vmatpush1.msra.mxu0 %v55
    %2073 = vmatprep.subr.mxu0 0.0
    %2074 = vmatpush1.msra.mxu0 %v56
    %2075 = vmatprep.subr.mxu0 0.0
    %2076 = vmatpush1.msra.mxu0 %v57
    %2077 = vmatprep.subr.mxu0 0.0
    %2078 = vmatpush1.msra.mxu0 %v58
    %2079 = vmatprep.subr.mxu0 0.0
    %2080 = vmatpush1.msra.mxu0 %v59
    %2081 = vmatprep.subr.mxu0 0.0
    %2082 = vmatpush1.msra.mxu0 %v60
    %2083 = vmatprep.subr.mxu0 0.0
    %2084 = vmatpush1.msra.mxu0 0.0
    %2085 = vmatprep.subr.mxu0 0.0
    %2086 = vmatpush1.msra.mxu0 0.0
    %2087 = vmatprep.subr.mxu0 0.0
    %2088 = vmatpush1.msra.mxu0 0.0
    %2089 = vmatprep.subr.mxu0 0.0
    %2090 = vmatpush1.msra.mxu0 0.0
    %2091 = vmatprep.subr.mxu0 0.0
    %2092 = vmatpush1.msra.mxu0 0.0
    %2093 = vmatprep.subr.mxu0 0.0
    %2094 = vmatpush1.msra.mxu0 0.0
    %2095 = vmatprep.subr.mxu0 0.0
    %2096 = vmatpush1.msra.mxu0 0.0
    %2097 = vmatprep.subr.mxu0 0.0
    %2098 = vmatpush1.msra.mxu0 0.0
    %2099 = vmatprep.subr.mxu0 0.0
    %2100 = vmatpush1.msra.mxu0 0.0
    %2101 = vmatprep.subr.mxu0 0.0
    %2102 = vmatpush1.msra.mxu0 0.0
    %2103 = vmatprep.subr.mxu0 0.0
    %2104 = vmatpush1.msra.mxu0 0.0
    %2105 = vmatprep.subr.mxu0 0.0
    %2106 = vmatpush1.msra.mxu0 0.0
    %2107 = vmatprep.subr.mxu0 0.0
    %2108 = vmatpush1.msra.mxu0 0.0
    %2109 = vmatprep.subr.mxu0 0.0
    %2110 = vmatpush1.msra.mxu0 0.0
    %2111 = vmatprep.subr.mxu0 0.0
    %2112 = vmatpush1.msra.mxu0 0.0
    %2113 = vmatprep.subr.mxu0 0.0
    %2114 = vmatpush1.msra.mxu0 0.0
    %2115 = vmatprep.subr.mxu0 0.0
    %2116 = vmatpush1.msra.mxu0 0.0
    %2117 = vmatprep.subr.mxu0 0.0
    %2118 = vmatpush1.msra.mxu0 0.0
    %2119 = vmatprep.subr.mxu0 0.0
    %2120 = vmatpush1.msra.mxu0 0.0
    %2121 = vmatprep.subr.mxu0 0.0
    %2122 = vmatpush1.msra.mxu0 0.0
    %2123 = vmatprep.subr.mxu0 0.0
    %2124 = vmatpush1.msra.mxu0 0.0
    %2125 = vmatprep.subr.mxu0 0.0
    %2126 = vmatpush1.msra.mxu0 0.0
    %2127 = vmatprep.subr.mxu0 0.0
    %2128 = vmatpush1.msra.mxu0 0.0
    %2129 = vmatprep.subr.mxu0 0.0
    %2130 = vmatpush1.msra.mxu0 0.0
    %2131 = vmatprep.mubr.f32.mxu0 0.0
    %2132 = vmatmul.mubr.f32.gmra.mrb[0].mxu0 %v2065
    %v2133 = vpop.f32.mrb[0].mxu0
    %v2134 = vadd.f32 %v464, %v2133
    %v2135 = vpop.f32.mrb[0].mxu0
    %2136 = vdwg.mxu0
    %v2137 = vxor.u32 %v2134, 2147483648
    %v2138 = vmul.f32 %v2137, 1.442695
    %v2139 = vpow.pop %v2138
    %v2140 = vadd.f32 %v2139, 1.0
    %v2141 = vrcp.pop %v2140
    %v2142 = vmul.f32 1.0, %v2141
    %2144 = vrot.lane.b32.xlu0 %v2134, 32
    %v2145 = vpop.permute.xlu0 %2144
    %v2147 = vmul.f32 %v2142, %v2145
    %2149 = vrot.lane.b32.xlu0 %v2147, 64
    %v2150 = vpop.permute.xlu0 %2149
    %v2152 = vadd.f32 %v2134, %v2150
    %v2153 = vtanh.pop %v2152
    %v2154 = vsub.f32 1.0, %v2142
    %2156 = vrot.lane.b32.xlu0 %v2153, 96
    %v2157 = vpop.permute.xlu0 %2156
    %v2159 = vmul.f32 %v2154, %v2157
    %v2160 = vmul.f32 %v2142, %v1842
    %v2161 = vadd.f32 %v2159, %v2160
    %2163 = vrot.lane.b32.xlu0 %v2161, 96
    %v2164 = vpop.permute.xlu0 %2163
    %vm2166 = vcmask 254976
    %2167 = vst.msk [vmem:[#allocation6] sm:$0x3] %vm2166, %v2164
    %v2168 = vlaneseq
    %v2169 = vshrl.u32 %v2168, 7
    %v2170 = vsub.s32 %v63, %v2169
    %v2171 = vrot.slane %v344, %v2170
    %v2172 = vlaneseq
    %v2173 = vshrl.u32 %v2172, 7
    %v2174 = vsub.s32 %v63, %v2173
    %v2175 = vrot.slane %v349, %v2174
    %v2176 = vlaneseq
    %v2177 = vshrl.u32 %v2176, 7
    %v2178 = vsub.s32 %v63, %v2177
    %v2179 = vrot.slane %v680, %v2178
    %v2180 = vlaneseq
    %v2181 = vshrl.u32 %v2180, 7
    %v2182 = vsub.s32 %v63, %v2181
    %v2183 = vrot.slane %v685, %v2182
    %v2184 = vlaneseq
    %v2185 = vshrl.u32 %v2184, 7
    %v2186 = vsub.s32 %v63, %v2185
    %v2187 = vrot.slane %v1000, %v2186
    %v2188 = vlaneseq
    %v2189 = vshrl.u32 %v2188, 7
    %v2190 = vsub.s32 %v63, %v2189
    %v2191 = vrot.slane %v1005, %v2190
    %v2192 = vlaneseq
    %v2193 = vshrl.u32 %v2192, 7
    %v2194 = vsub.s32 %v63, %v2193
    %v2195 = vrot.slane %v1320, %v2194
    %v2196 = vlaneseq
    %v2197 = vshrl.u32 %v2196, 7
    %v2198 = vsub.s32 %v63, %v2197
    %v2199 = vrot.slane %v1325, %v2198
    %v2200 = vlaneseq
    %v2201 = vshrl.u32 %v2200, 7
    %v2202 = vsub.s32 %v63, %v2201
    %v2203 = vrot.slane %v1640, %v2202
    %v2204 = vlaneseq
    %v2205 = vshrl.u32 %v2204, 7
    %v2206 = vsub.s32 %v63, %v2205
    %v2207 = vrot.slane %v1645, %v2206
    %v2208 = vlaneseq
    %v2209 = vshrl.u32 %v2208, 7
    %v2210 = vsub.s32 %v63, %v2209
    %v2211 = vrot.slane %v1958, %v2210
    %v2212 = vlaneseq
    %v2213 = vshrl.u32 %v2212, 7
    %v2214 = vsub.s32 %v63, %v2213
    %v2215 = vrot.slane %v1963, %v2214
    %v2216 = vsel %vm282, %v2175, %v2171
    %v2217 = vsel %vm282, %v2183, %v2179
    %v2218 = vsel %vm282, %v2191, %v2187
    %v2219 = vsel %vm282, %v2199, %v2195
    %v2220 = vsel %vm282, %v2207, %v2203
    %v2221 = vsel %vm282, %v2215, %v2211
    %2228 = vst.msk [vmem:[#allocation8] sm:$0x3] %vm285, %v2216
    %2229 = vst.msk [vmem:[#allocation8 + $0x2] sm:$0x3] %vm285, %v2217
    %2230 = vst.msk [vmem:[#allocation8 + $0x4] sm:$0x3] %vm285, %v2218
    %2231 = vst.msk [vmem:[#allocation8 + $0x6] sm:$0x3] %vm285, %v2219
    %2232 = vst.msk [vmem:[#allocation8 + $0x8] sm:$0x3] %vm285, %v2220
    %2233 = vst.msk [vmem:[#allocation8 + $0xa] sm:$0x3] %vm285, %v2221
    %v2234 = vrot.slane %v884, 6
    %v2236 = vrot.slane %v1204, 4
    %v2238 = vrot.slane %v1524, 2
    %v2240 = vrot.slane %v2161, 6
    %v2242 = vsel %vm126, %v564, %v2234
    %v2243 = vsel %vm130, %v2242, %v2236
    %v2244 = vsel %vm134, %v2243, %v2238
    %v2245 = vsel %vm126, %v1842, %v2240
    %v2246 = vld [vmem:[%s8] sm:$0xff]
    %v2247 = vld [vmem:[%s8 + $0x8] sm:$0xff]
    %v2248 = vld [vmem:[%s8 + $0x10] sm:$0xff]
    %v2249 = vld [vmem:[%s8 + $0x18] sm:$0xff]
    %v2250 = vld [vmem:[%s9] sm:$0x1]
    %v2252 = vlaneseq
    %v2253 = vshrl.u32 %v2252, 7
    %v2254 = vsub.s32 0, %v2253
    %v2255 = vrot.slane %v2250, %v2254
    %2259 = vrot.lane.b32.xlu0 %v2244, 96
    %v2260 = vpop.permute.xlu0 %2259
    %2261 = vrot.lane.b32.xlu0 %v2245, 96
    %v2262 = vpop.permute.xlu0 %2261
    %v2263 = vsel %vm265, %v2260, 0
    %v2265 = vsel %vm265, %v2262, 0
    %2267 = vmatprep.subr.mxu0 0.0
    %2268 = vmatpush1.msra.mxu0 %v2246
    %2269 = vmatprep.subr.mxu0 0.0
    %2270 = vmatpush1.msra.mxu0 %v2247
    %2271 = vmatprep.subr.mxu0 0.0
    %2272 = vmatpush1.msra.mxu0 %v2248
    %2273 = vmatprep.subr.mxu0 0.0
    %2274 = vmatpush1.msra.mxu0 %v2249
    %2275 = vmatprep.subr.mxu0 0.0
    %2276 = vmatpush1.msra.mxu0 0.0
    %2277 = vmatprep.subr.mxu0 0.0
    %2278 = vmatpush1.msra.mxu0 0.0
    %2279 = vmatprep.subr.mxu0 0.0
    %2280 = vmatpush1.msra.mxu0 0.0
    %2281 = vmatprep.subr.mxu0 0.0
    %2282 = vmatpush1.msra.mxu0 0.0
    %2283 = vmatprep.subr.mxu0 0.0
    %2284 = vmatpush1.msra.mxu0 0.0
    %2285 = vmatprep.subr.mxu0 0.0
    %2286 = vmatpush1.msra.mxu0 0.0
    %2287 = vmatprep.subr.mxu0 0.0
    %2288 = vmatpush1.msra.mxu0 0.0
    %2289 = vmatprep.subr.mxu0 0.0
    %2290 = vmatpush1.msra.mxu0 0.0
    %2291 = vmatprep.subr.mxu0 0.0
    %2292 = vmatpush1.msra.mxu0 0.0
    %2293 = vmatprep.subr.mxu0 0.0
    %2294 = vmatpush1.msra.mxu0 0.0
    %2295 = vmatprep.subr.mxu0 0.0
    %2296 = vmatpush1.msra.mxu0 0.0
    %2297 = vmatprep.subr.mxu0 0.0
    %2298 = vmatpush1.msra.mxu0 0.0
    %2299 = vmatprep.subr.mxu0 0.0
    %2300 = vmatpush1.msra.mxu0 0.0
    %2301 = vmatprep.subr.mxu0 0.0
    %2302 = vmatpush1.msra.mxu0 0.0
    %2303 = vmatprep.subr.mxu0 0.0
    %2304 = vmatpush1.msra.mxu0 0.0
    %2305 = vmatprep.subr.mxu0 0.0
    %2306 = vmatpush1.msra.mxu0 0.0
    %2307 = vmatprep.subr.mxu0 0.0
    %2308 = vmatpush1.msra.mxu0 0.0
    %2309 = vmatprep.subr.mxu0 0.0
    %2310 = vmatpush1.msra.mxu0 0.0
    %2311 = vmatprep.subr.mxu0 0.0
    %2312 = vmatpush1.msra.mxu0 0.0
    %2313 = vmatprep.subr.mxu0 0.0
    %2314 = vmatpush1.msra.mxu0 0.0
    %2315 = vmatprep.subr.mxu0 0.0
    %2316 = vmatpush1.msra.mxu0 0.0
    %2317 = vmatprep.subr.mxu0 0.0
    %2318 = vmatpush1.msra.mxu0 0.0
    %2319 = vmatprep.subr.mxu0 0.0
    %2320 = vmatpush1.msra.mxu0 0.0
    %2321 = vmatprep.subr.mxu0 0.0
    %2322 = vmatpush1.msra.mxu0 0.0
    %2323 = vmatprep.subr.mxu0 0.0
    %2324 = vmatpush1.msra.mxu0 0.0
    %2325 = vmatprep.subr.mxu0 0.0
    %2326 = vmatpush1.msra.mxu0 0.0
    %2327 = vmatprep.subr.mxu0 0.0
    %2328 = vmatpush1.msra.mxu0 0.0
    %2329 = vmatprep.subr.mxu0 0.0
    %2330 = vmatpush1.msra.mxu0 0.0
    %2331 = vmatprep.mubr.f32.mxu0 0.0
    %2332 = vmatmul.mubr.f32.gmra.mrb[0].mxu0 %v2263
    %v2333 = vpop.f32.mrb[0].mxu0
    %v2334 = vadd.f32 %v2255, %v2333
    %v2335 = vpop.f32.mrb[0].mxu0
    %2336 = vmatprep.mubr.f32.mxu0 0.0
    %2337 = vmatmul.mubr.f32.gmra.mrb[0].mxu0 %v2265
    %v2338 = vpop.f32.mrb[0].mxu0
    %v2339 = vadd.f32 %v2255, %v2338
    %v2340 = vpop.f32.mrb[0].mxu0
    %2341 = vdwg.mxu0
    %v2342 = vsel %vm144, %v2334, -inf
    %2343 = vmax.xlane.f32.xlu0 %v2342
    %v2344 = vpop.xlane.xlu0 %2343
    %vm2345 = vcmask 158720
    %v2346 = vsel %vm2345, %v2339, -inf
    %2347 = vmax.xlane.f32.xlu0 %v2346
    %v2348 = vpop.xlane.xlu0 %2347
    %v2349 = vsub.f32 %v2334, %v2344
    %v2350 = vsub.f32 %v2339, %v2348
    %v2351 = vmul.f32 %v2349, 1.442695
    %v2352 = vpow.pop %v2351
    %v2353 = vmul.f32 %v2350, 1.442695
    %v2354 = vpow.pop %v2353
    %v2355 = vsel %vm144, %v2352, 0.0
    %2356 = vadd.xlane.f32.xlu0 %v2355
    %v2357 = vpop.xlane.xlu0 %2356
    %v2358 = vsel %vm2345, %v2354, 0.0
    %2359 = vadd.xlane.f32.xlu0 %v2358
    %v2360 = vpop.xlane.xlu0 %2359
    %v2361 = vlog2.pop %v2357
    %v2362 = vmul.f32 %v2361, 0.6931472
    %v2363 = vlog2.pop %v2360
    %v2364 = vmul.f32 %v2363, 0.6931472
    %v2365 = vadd.f32 %v2362, %v2344
    %v2366 = vadd.f32 %v2364, %v2348
    %v2367 = vsub.f32 %v2334, %v2365
    %v2368 = vsub.f32 %v2339, %v2366
    %v2371 = vcombine.high %v2367, %v2367
    %v2373 = vunpack.c.l.s4 1983009808
    %v2374 = vunpack.c.0.s8 %v2373
    %v2375 = vlaneseq
    %v2376 = vshrl.u32 %v2375, 7
    %v2377 = vsub.s32 %v2374, %v2376
    %v2378 = vrot.slane %v2367, %v2377
    %v2380 = vunpack.c.l.s4 1983009808
    %v2381 = vunpack.c.0.s8 %v2380
    %v2382 = vlaneseq
    %v2383 = vshrl.u32 %v2382, 7
    %v2384 = vsub.s32 %v2381, %v2383
    %v2385 = vrot.slane %v2371, %v2384
    %v2386 = vcombine.high %v2378, %v2378
    %v2387 = vcombine.high %v2385, %v2385
    %v2389 = vunpack.c.l.s4 1983009808
    %v2390 = vunpack.c.0.s8 %v2389
    %v2391 = vlaneseq
    %v2392 = vshrl.u32 %v2391, 7
    %v2393 = vsub.s32 %v2390, %v2392
    %v2394 = vrot.slane %v2368, %v2393
    %v2395 = vcombine.high %v2394, %v2394
    %vm2402 = vcmask 156672
    %2403 = vst.msk [vmem:[#allocation4] sm:$0x3] %vm2402, %v2378
    %2404 = vst.msk [vmem:[#allocation4 + $0x2] sm:$0x3] %vm2402, %v2386
    %2405 = vst.msk [vmem:[#allocation4 + $0x4] sm:$0x3] %vm2402, %v2385
    %2406 = vst.msk [vmem:[#allocation4 + $0x6] sm:$0x3] %vm2402, %v2387
    %2407 = vst.msk [vmem:[#allocation4 + $0x8] sm:$0x3] %vm2402, %v2394
    %2408 = vst.msk [vmem:[#allocation4 + $0xa] sm:$0x3] %vm2402, %v2395
    // Predicated region
    $region38: #{tpu_custom_call.1} parent=1 // pred_check
      _
    $region39: #{tpu_custom_call.1} parent=1 // pred_check_branch
      %2410 = sbr.rel (0) target = $region41
    $region40: #{tpu_custom_call.1} parent=1 // pred_region
      %s2412 = ssub.s32 192, 192
      %2413 = vsyncadd [#allocation5], %s2412
      %s2414 = sshll.u32 [#allocation4], 4
      %s2415 = int_to_ptr.vmem [resolvable:$true] %s2414
      %2420 = dma.vmem_to_hbm [thread:$0]  %s2415, 192, %s10, [#allocation5], 32, 32, 2
    $region41: #{tpu_custom_call.1} parent=1 // pred_fallthru
      _
    // Predicated region
    $region42: #{tpu_custom_call.1} parent=1 // pred_check
      _
    $region43: #{tpu_custom_call.1} parent=1 // pred_check_branch
      %2422 = sbr.rel (0) target = $region45
    $region44: #{tpu_custom_call.1} parent=1 // pred_region
      %s2424 = ssub.s32 32, 32
      %2425 = vsyncadd [#allocation7], %s2424
      %s2427 = sshll.u32 [#allocation6], 4
      %s2428 = int_to_ptr.vmem [resolvable:$true] %s2427
      %2430 = dma.vmem_to_hbm [thread:$0]  %s2428, 32, %s11, [#allocation7]
    $region45: #{tpu_custom_call.1} parent=1 // pred_fallthru
      _
    // Predicated region
    $region46: #{tpu_custom_call.1} parent=1 // pred_check
      _
    $region47: #{tpu_custom_call.1} parent=1 // pred_check_branch
      %2432 = sbr.rel (0) target = $region49
    $region48: #{tpu_custom_call.1} parent=1 // pred_region
      %s2434 = ssub.s32 192, 192
      %2435 = vsyncadd [#allocation7], %s2434
      %s2436 = sshll.u32 [#allocation8], 4
      %s2437 = int_to_ptr.vmem [resolvable:$true] %s2436
      %2442 = dma.vmem_to_hbm [thread:$0]  %s2437, 192, %s12, [#allocation7], 32, 32, 2
    $region49: #{tpu_custom_call.1} parent=1 // pred_fallthru
      _
    // Predicated region
    $region50: #{tpu_custom_call.1} parent=1 // pred_check
      _
    $region51: #{tpu_custom_call.1} parent=1 // pred_check_branch
      %2444 = sbr.rel (0) target = $region53
    $region52: #{tpu_custom_call.1} parent=1 // pred_region
      %2445 = dma.done [#allocation5], 192
    $region53: #{tpu_custom_call.1} parent=1 // pred_fallthru
      _
    // Predicated region
    $region54: #{tpu_custom_call.1} parent=1 // pred_check
      _
    $region55: #{tpu_custom_call.1} parent=1 // pred_check_branch
      %2447 = sbr.rel (0) target = $region57
    $region56: #{tpu_custom_call.1} parent=1 // pred_region
      %2448 = dma.done [#allocation7], 32
    $region57: #{tpu_custom_call.1} parent=1 // pred_fallthru
      _
    // Predicated region
    $region58: #{tpu_custom_call.1} parent=1 // pred_check
      _
    $region59: #{tpu_custom_call.1} parent=1 // pred_check_branch
      %2450 = sbr.rel (0) target = $region61
    $region60: #{tpu_custom_call.1} parent=1 // pred_region
      %2451 = dma.done [#allocation7], 192
    $region61: #{tpu_custom_call.1} parent=1 // pred_fallthru
      _
    %2452 = vsyncpa [#allocation5], 1
    %2453 = vsyncpa [#allocation7], 1

</llo_original>
